<compile_context>
chip_gen: v5e
topology: v5e:2x2
jax: 0.10.0
libtpu: 0.0.40
codegen_flags: <defaults>
</compile_context>

<pallas_src>
import functools

import jax
import jax.numpy as jnp
from jax.experimental import pallas as pl
from jax.experimental.pallas import tpu as pltpu


# ----------------------------- helpers --------------------------------------
def _round_up(x, m):
    return ((x + m - 1) // m) * m


def _centered_dft_matrix(n, inverse=False):
    """M such that fftshift((i)fft(ifftshift(v), norm='ortho')) == M @ v."""
    eye = jnp.eye(n, dtype=jnp.complex64)
    shifted = jnp.fft.ifftshift(eye, axes=0)
    f = (jnp.fft.ifft if inverse else jnp.fft.fft)(shifted, axis=0, norm="ortho")
    return jnp.fft.fftshift(f, axes=0)


def _embed(mat, n_pad):
    """Zero-embed a square matrix into the top-left of an (n_pad, n_pad) one."""
    out = jnp.zeros((n_pad, n_pad), dtype=mat.dtype)
    return out.at[: mat.shape[0], : mat.shape[1]].set(mat)


def _cmm(ar, ai, s_a, br, bi, s_b, dt):
    """Complex matmul (ar + i*ai) @ (br + i*bi) with 3 real MXU matmuls.

    s_a = ar + ai and s_b = br + bi are supplied by the caller so that the sum
    on the constant operand is computed only once per grid step.
    """
    f32 = jnp.float32
    t1 = jnp.dot(ar.astype(dt), br.astype(dt), preferred_element_type=f32)
    t2 = jnp.dot(ai.astype(dt), bi.astype(dt), preferred_element_type=f32)
    t3 = jnp.dot(s_a.astype(dt), s_b.astype(dt), preferred_element_type=f32)
    return t1 - t2, t3 - t1 - t2


def _vmem_limit_bytes():
    try:
        cap = int(pltpu.get_tpu_info().vmem_capacity_bytes)
    except Exception:
        cap = 64 * 1024 * 1024          # conservative (v7x per-core VMEM)
    return max(32 * 1024 * 1024, min(cap * 3 // 4, 100 * 1024 * 1024))


def _pick_tile_batch(bc, hp, wp, vmem_limit):
    """Largest divisor of bc whose working set fits, preferring >=2 grid steps."""
    plane = hp * wp * 4
    const_bytes = (4 * hp * hp + 4 * wp * wp + hp * wp) * 4 * 2  # double-buffered
    budget = max(plane, int(vmem_limit * 0.7) - const_bytes)
    per_image = plane * (6 * 2 + 12)    # 6 DMA planes double-buffered + ~12 temps
    cap = max(1, budget // per_image)
    divisors = [d for d in range(1, bc + 1) if bc % d == 0]
    best = 1
    for d in divisors:                  # prefer >= 2 grid steps (v7x megacore)
        if d <= cap and bc // d >= 2:
            best = max(best, d)
    if best == 1:
        for d in divisors:
            if d <= cap:
                best = max(best, d)
    return best


# ----------------------------- kernel ----------------------------------------
def dc_kernel(fh_re_ref, fh_im_ref, gh_re_ref, gh_im_ref,
              fwt_re_ref, fwt_im_ref, gwt_re_ref, gwt_im_ref,
              w_ref,
              xr_ref, xi_ref, k0r_ref, k0i_ref,
              or_ref, oi_ref,
              *, tb, hp, compute_dtype):
    dt = compute_dtype

    # Constant operands; their block index never changes, so they are fetched
    # only once by the pipeline.  The +/- sums for Karatsuba are cheap VPU adds
    # on small (Hp,Hp)/(Wp,Wp) tiles.
    fh_re, fh_im = fh_re_ref[...], fh_im_ref[...]
    gh_re, gh_im = gh_re_ref[...], gh_im_ref[...]
    fwt_re, fwt_im = fwt_re_ref[...], fwt_im_ref[...]
    gwt_re, gwt_im = gwt_re_ref[...], gwt_im_ref[...]
    fh_s, gh_s = fh_re + fh_im, gh_re + gh_im
    fwt_s, gwt_s = fwt_re + fwt_im, gwt_re + gwt_im
    w = w_ref[...]                                  # mask * (1 - lambda), (Hp, Wp)

    xr, xi = xr_ref[...], xi_ref[...]               # (tb*Hp, Wp): tb images stacked
    k0r, k0i = k0r_ref[...], k0i_ref[...]

    # ---- W-side forward transform, all tb images in one matmul: Y = X @ Fw^T
    yr, yi = _cmm(xr, xi, xr + xi, fwt_re, fwt_im, fwt_s, dt)

    # ---- per-image H-side transform, k-space DC blend, H-side inverse -------
    ur_parts, ui_parts = [], []
    for t in range(tb):                             # static unroll over the tile batch
        sl = slice(t * hp, (t + 1) * hp)
        yr_t, yi_t = yr[sl], yi[sl]
        ar, ai = _cmm(fh_re, fh_im, fh_s, yr_t, yi_t, yr_t + yi_t, dt)  # A = Fh @ Y
        # kdc = A + w*(k0 - A)  ==  (1-m)*A + m*(lam*A + (1-lam)*k0)
        kr = ar + w * (k0r[sl] - ar)
        ki = ai + w * (k0i[sl] - ai)
        ur_t, ui_t = _cmm(gh_re, gh_im, gh_s, kr, ki, kr + ki, dt)      # U = Gh @ K
        ur_parts.append(ur_t)
        ui_parts.append(ui_t)
    ur = ur_parts[0] if tb == 1 else jnp.concatenate(ur_parts, axis=0)
    ui = ui_parts[0] if tb == 1 else jnp.concatenate(ui_parts, axis=0)

    # ---- W-side inverse transform, all tb images in one matmul: out = U @ Gw^T
    o_r, o_i = _cmm(ur, ui, ur + ui, gwt_re, gwt_im, gwt_s, dt)
    or_ref[...] = o_r
    oi_ref[...] = o_i


# ----------------------------- wrapper ----------------------------------------
def data_consistency(x_re, x_im, k0_re, k0_im, mask, lambda_,
                     compute_dtype=jnp.float32):
    """DataConsistency forward.  Returns (out_re, out_im), each (N, C, H, W)."""
    N, C, H, W = x_re.shape
    BC = N * C
    f32 = jnp.float32

    # Padded sizes: H to a sublane multiple, small W up to a dense 128-lane row.
    Hp = _round_up(H, 8)
    Wp = _round_up(W, 128) if W < 128 else W

    vmem_limit = _vmem_limit_bytes()
    TB = _pick_tile_batch(BC, Hp, Wp, vmem_limit)

    # Centered orthonormal DFT operators (forward + explicit inverse), embedded
    # into the padded sizes.
    fh = _embed(_centered_dft_matrix(H), Hp)
    gh = _embed(_centered_dft_matrix(H, inverse=True), Hp)
    fwt = _embed(_centered_dft_matrix(W).T, Wp)
    gwt = _embed(_centered_dft_matrix(W, inverse=True).T, Wp)
    consts = [jnp.real(fh).astype(f32), jnp.imag(fh).astype(f32),
              jnp.real(gh).astype(f32), jnp.imag(gh).astype(f32),
              jnp.real(fwt).astype(f32), jnp.imag(fwt).astype(f32),
              jnp.real(gwt).astype(f32), jnp.imag(gwt).astype(f32)]

    # Hoisted data-consistency weight (zero in the padded region).
    lam = jnp.squeeze(lambda_.astype(f32), 0)
    w = jnp.zeros((Hp, Wp), f32).at[:H, :W].set(mask.astype(f32) * (1.0 - lam))

    def prep(a):
        a = a.reshape(BC, H, W).astype(f32)
        a = jnp.pad(a, ((0, 0), (0, Hp - H), (0, Wp - W)))
        return a.reshape(BC * Hp, Wp)

    data = [prep(x_re), prep(x_im), prep(k0_re), prep(k0_im)]

    const_spec_h = pl.BlockSpec((Hp, Hp), lambda i: (0, 0))
    const_spec_w = pl.BlockSpec((Wp, Wp), lambda i: (0, 0))
    w_spec = pl.BlockSpec((Hp, Wp), lambda i: (0, 0))
    slab = pl.BlockSpec((TB * Hp, Wp), lambda i: (i, 0))

    kernel = functools.partial(dc_kernel, tb=TB, hp=Hp,
                               compute_dtype=compute_dtype)

    o_re, o_im = pl.pallas_call(
        kernel,
        grid=(BC // TB,),
        in_specs=[const_spec_h] * 4 + [const_spec_w] * 4 + [w_spec] + [slab] * 4,
        out_specs=[slab, slab],
        out_shape=[jax.ShapeDtypeStruct((BC * Hp, Wp), f32),
                   jax.ShapeDtypeStruct((BC * Hp, Wp), f32)],
        compiler_params=pltpu.CompilerParams(
            dimension_semantics=("parallel",),
            vmem_limit_bytes=vmem_limit),
    )(*consts, w, *data)

    def post(a):
        return a.reshape(BC, Hp, Wp)[:, :H, :W].reshape(N, C, H, W)

    return post(o_re), post(o_im)


# ---------------- pure-JAX reference (complex fft) for validation -------------
def _fft2c(x):
    return jnp.fft.fftshift(
        jnp.fft.fft2(jnp.fft.ifftshift(x, axes=(-2, -1)),
                     axes=(-2, -1), norm="ortho"), axes=(-2, -1))


def _ifft2c(x):
    return jnp.fft.fftshift(
        jnp.fft.ifft2(jnp.fft.ifftshift(x, axes=(-2, -1)),
                      axes=(-2, -1), norm="ortho"), axes=(-2, -1))


def data_consistency_ref(x, k0, mask, lambda_):
    lam = jnp.squeeze(lambda_, 0)
    a_x = _fft2c(x)
    k_dc = (1 - mask) * a_x + mask * (lam * a_x + (1 - lam) * k0)
    return _ifft2c(k_dc)


if __name__ == "__main__":
    key = jax.random.PRNGKey(0)
    k1, k2, k3, k4, k5 = jax.random.split(key, 5)

    N, C, H, W = 2, 4, 16, 16
    x_re = jax.random.normal(k1, (N, C, H, W), dtype=jnp.float32)
    x_im = jax.random.normal(k2, (N, C, H, W), dtype=jnp.float32)
    k0_re = jax.random.normal(k3, (N, C, H, W), dtype=jnp.float32)
    k0_im = jax.random.normal(k4, (N, C, H, W), dtype=jnp.float32)
    mask = (jax.random.uniform(k5, (H, W)) > 0.5).astype(jnp.float32)
    lambda_ = jnp.array([0.7], dtype=jnp.float32)

    ref = data_consistency_ref(x_re + 1j * x_im, k0_re + 1j * k0_im,
                               mask, lambda_)

    # f32 matmul path (default).
    o_re, o_im = jax.block_until_ready(
        data_consistency(x_re, x_im, k0_re, k0_im, mask, lambda_))
    assert jnp.allclose(o_re, jnp.real(ref), atol=2e-4), "real part mismatch"
    assert jnp.allclose(o_im, jnp.imag(ref), atol=2e-4), "imag part mismatch"

    # bf16 matmul path (MXU-peak option for v6e/v7x), looser tolerance.
    ob_re, ob_im = jax.block_until_ready(
        data_consistency(x_re, x_im, k0_re, k0_im, mask, lambda_,
                         compute_dtype=jnp.bfloat16))
    rel = (jnp.linalg.norm((ob_re + 1j * ob_im) - ref)
           / jnp.linalg.norm(ref))
    assert rel < 5e-2, f"bf16 path relative error too high: {rel}"

    print("KERNEL_OK")
</pallas_src>

<mosaic_0001>
module attributes {stable_mosaic.version = 11 : i64} {
  func.func @dc_kernel(%arg0: i32, %arg1: memref<16x16xf32, #tpu.memory_space<vmem>>, %arg2: memref<16x16xf32, #tpu.memory_space<vmem>>, %arg3: memref<16x16xf32, #tpu.memory_space<vmem>>, %arg4: memref<16x16xf32, #tpu.memory_space<vmem>>, %arg5: memref<128x128xf32, #tpu.memory_space<vmem>>, %arg6: memref<128x128xf32, #tpu.memory_space<vmem>>, %arg7: memref<128x128xf32, #tpu.memory_space<vmem>>, %arg8: memref<128x128xf32, #tpu.memory_space<vmem>>, %arg9: memref<16x128xf32, #tpu.memory_space<vmem>>, %arg10: memref<64x128xf32, #tpu.memory_space<vmem>>, %arg11: memref<64x128xf32, #tpu.memory_space<vmem>>, %arg12: memref<64x128xf32, #tpu.memory_space<vmem>>, %arg13: memref<64x128xf32, #tpu.memory_space<vmem>>, %arg14: memref<64x128xf32, #tpu.memory_space<vmem>>, %arg15: memref<64x128xf32, #tpu.memory_space<vmem>>) attributes {dimension_semantics = [#tpu.dimension_semantics<parallel>], iteration_bounds = array<i64: 2>, scalar_prefetch = 0 : i64, scratch_operands = 0 : i64, tpu.core_type = #tpu.core_type<tc>, window_params = [{pipeline_mode = #tpu.pipeline_mode<synchronous>, transform_indices = @transform_0, window_bounds = array<i64: 16, 16>}, {pipeline_mode = #tpu.pipeline_mode<synchronous>, transform_indices = @transform_1, window_bounds = array<i64: 16, 16>}, {pipeline_mode = #tpu.pipeline_mode<synchronous>, transform_indices = @transform_2, window_bounds = array<i64: 16, 16>}, {pipeline_mode = #tpu.pipeline_mode<synchronous>, transform_indices = @transform_3, window_bounds = array<i64: 16, 16>}, {pipeline_mode = #tpu.pipeline_mode<synchronous>, transform_indices = @transform_4, window_bounds = array<i64: 128, 128>}, {pipeline_mode = #tpu.pipeline_mode<synchronous>, transform_indices = @transform_5, window_bounds = array<i64: 128, 128>}, {pipeline_mode = #tpu.pipeline_mode<synchronous>, transform_indices = @transform_6, window_bounds = array<i64: 128, 128>}, {pipeline_mode = #tpu.pipeline_mode<synchronous>, transform_indices = @transform_7, window_bounds = array<i64: 128, 128>}, {pipeline_mode = #tpu.pipeline_mode<synchronous>, transform_indices = @transform_8, window_bounds = array<i64: 16, 128>}, {transform_indices = @transform_9, window_bounds = array<i64: 64, 128>}, {transform_indices = @transform_10, window_bounds = array<i64: 64, 128>}, {transform_indices = @transform_11, window_bounds = array<i64: 64, 128>}, {transform_indices = @transform_12, window_bounds = array<i64: 64, 128>}, {transform_indices = @transform_13, window_bounds = array<i64: 64, 128>}, {transform_indices = @transform_14, window_bounds = array<i64: 64, 128>}]} {
    %c0 = arith.constant 0 : index
    %c0_0 = arith.constant 0 : index
    %0 = vector.load %arg1[%c0, %c0_0] : memref<16x16xf32, #tpu.memory_space<vmem>>, vector<16x16xf32>
    %c0_1 = arith.constant 0 : index
    %c0_2 = arith.constant 0 : index
    %1 = vector.load %arg2[%c0_1, %c0_2] : memref<16x16xf32, #tpu.memory_space<vmem>>, vector<16x16xf32>
    %c0_3 = arith.constant 0 : index
    %c0_4 = arith.constant 0 : index
    %2 = vector.load %arg3[%c0_3, %c0_4] : memref<16x16xf32, #tpu.memory_space<vmem>>, vector<16x16xf32>
    %c0_5 = arith.constant 0 : index
    %c0_6 = arith.constant 0 : index
    %3 = vector.load %arg4[%c0_5, %c0_6] : memref<16x16xf32, #tpu.memory_space<vmem>>, vector<16x16xf32>
    %c0_7 = arith.constant 0 : index
    %c0_8 = arith.constant 0 : index
    %4 = vector.load %arg5[%c0_7, %c0_8] : memref<128x128xf32, #tpu.memory_space<vmem>>, vector<128x128xf32>
    %c0_9 = arith.constant 0 : index
    %c0_10 = arith.constant 0 : index
    %5 = vector.load %arg6[%c0_9, %c0_10] : memref<128x128xf32, #tpu.memory_space<vmem>>, vector<128x128xf32>
    %c0_11 = arith.constant 0 : index
    %c0_12 = arith.constant 0 : index
    %6 = vector.load %arg7[%c0_11, %c0_12] : memref<128x128xf32, #tpu.memory_space<vmem>>, vector<128x128xf32>
    %c0_13 = arith.constant 0 : index
    %c0_14 = arith.constant 0 : index
    %7 = vector.load %arg8[%c0_13, %c0_14] : memref<128x128xf32, #tpu.memory_space<vmem>>, vector<128x128xf32>
    %8 = arith.addf %0, %1 : vector<16x16xf32>
    %9 = arith.addf %2, %3 : vector<16x16xf32>
    %10 = arith.addf %4, %5 : vector<128x128xf32>
    %11 = arith.addf %6, %7 : vector<128x128xf32>
    %c0_15 = arith.constant 0 : index
    %c0_16 = arith.constant 0 : index
    %12 = vector.load %arg9[%c0_15, %c0_16] : memref<16x128xf32, #tpu.memory_space<vmem>>, vector<16x128xf32>
    %c0_17 = arith.constant 0 : index
    %c0_18 = arith.constant 0 : index
    %13 = vector.load %arg10[%c0_17, %c0_18] : memref<64x128xf32, #tpu.memory_space<vmem>>, vector<64x128xf32>
    %c0_19 = arith.constant 0 : index
    %c0_20 = arith.constant 0 : index
    %14 = vector.load %arg11[%c0_19, %c0_20] : memref<64x128xf32, #tpu.memory_space<vmem>>, vector<64x128xf32>
    %c0_21 = arith.constant 0 : index
    %c0_22 = arith.constant 0 : index
    %15 = vector.load %arg12[%c0_21, %c0_22] : memref<64x128xf32, #tpu.memory_space<vmem>>, vector<64x128xf32>
    %c0_23 = arith.constant 0 : index
    %c0_24 = arith.constant 0 : index
    %16 = vector.load %arg13[%c0_23, %c0_24] : memref<64x128xf32, #tpu.memory_space<vmem>>, vector<64x128xf32>
    %17 = arith.addf %13, %14 : vector<64x128xf32>
    %cst = arith.constant dense<0.000000e+00> : vector<64x128xf32>
    %18 = tpu.matmul %13, %4, %cst {dimension_numbers = #tpu.dot_dimension_numbers<[1], [0], [0], [1], [0, 0, 1, 1], [], []>} : vector<64x128xf32>, vector<128x128xf32>, vector<64x128xf32> -> vector<64x128xf32>
    %cst_25 = arith.constant dense<0.000000e+00> : vector<64x128xf32>
    %19 = tpu.matmul %14, %5, %cst_25 {dimension_numbers = #tpu.dot_dimension_numbers<[1], [0], [0], [1], [0, 0, 1, 1], [], []>} : vector<64x128xf32>, vector<128x128xf32>, vector<64x128xf32> -> vector<64x128xf32>
    %cst_26 = arith.constant dense<0.000000e+00> : vector<64x128xf32>
    %20 = tpu.matmul %17, %10, %cst_26 {dimension_numbers = #tpu.dot_dimension_numbers<[1], [0], [0], [1], [0, 0, 1, 1], [], []>} : vector<64x128xf32>, vector<128x128xf32>, vector<64x128xf32> -> vector<64x128xf32>
    %21 = arith.subf %18, %19 : vector<64x128xf32>
    %22 = arith.subf %20, %18 : vector<64x128xf32>
    %23 = arith.subf %22, %19 : vector<64x128xf32>
    %24 = vector.extract_strided_slice %21 {offsets = [0, 0], sizes = [16, 128], strides = [1, 1]} : vector<64x128xf32> to vector<16x128xf32>
    %25 = vector.extract_strided_slice %23 {offsets = [0, 0], sizes = [16, 128], strides = [1, 1]} : vector<64x128xf32> to vector<16x128xf32>
    %26 = arith.addf %24, %25 : vector<16x128xf32>
    %cst_27 = arith.constant dense<0.000000e+00> : vector<16x128xf32>
    %27 = tpu.matmul %0, %24, %cst_27 {dimension_numbers = #tpu.dot_dimension_numbers<[1], [0], [0], [1], [0, 0, 1, 1], [], []>} : vector<16x16xf32>, vector<16x128xf32>, vector<16x128xf32> -> vector<16x128xf32>
    %cst_28 = arith.constant dense<0.000000e+00> : vector<16x128xf32>
    %28 = tpu.matmul %1, %25, %cst_28 {dimension_numbers = #tpu.dot_dimension_numbers<[1], [0], [0], [1], [0, 0, 1, 1], [], []>} : vector<16x16xf32>, vector<16x128xf32>, vector<16x128xf32> -> vector<16x128xf32>
    %cst_29 = arith.constant dense<0.000000e+00> : vector<16x128xf32>
    %29 = tpu.matmul %8, %26, %cst_29 {dimension_numbers = #tpu.dot_dimension_numbers<[1], [0], [0], [1], [0, 0, 1, 1], [], []>} : vector<16x16xf32>, vector<16x128xf32>, vector<16x128xf32> -> vector<16x128xf32>
    %30 = arith.subf %27, %28 : vector<16x128xf32>
    %31 = arith.subf %29, %27 : vector<16x128xf32>
    %32 = arith.subf %31, %28 : vector<16x128xf32>
    %33 = vector.extract_strided_slice %15 {offsets = [0, 0], sizes = [16, 128], strides = [1, 1]} : vector<64x128xf32> to vector<16x128xf32>
    %34 = arith.subf %33, %30 : vector<16x128xf32>
    %35 = arith.mulf %12, %34 : vector<16x128xf32>
    %36 = arith.addf %30, %35 : vector<16x128xf32>
    %37 = vector.extract_strided_slice %16 {offsets = [0, 0], sizes = [16, 128], strides = [1, 1]} : vector<64x128xf32> to vector<16x128xf32>
    %38 = arith.subf %37, %32 : vector<16x128xf32>
    %39 = arith.mulf %12, %38 : vector<16x128xf32>
    %40 = arith.addf %32, %39 : vector<16x128xf32>
    %41 = arith.addf %36, %40 : vector<16x128xf32>
    %cst_30 = arith.constant dense<0.000000e+00> : vector<16x128xf32>
    %42 = tpu.matmul %2, %36, %cst_30 {dimension_numbers = #tpu.dot_dimension_numbers<[1], [0], [0], [1], [0, 0, 1, 1], [], []>} : vector<16x16xf32>, vector<16x128xf32>, vector<16x128xf32> -> vector<16x128xf32>
    %cst_31 = arith.constant dense<0.000000e+00> : vector<16x128xf32>
    %43 = tpu.matmul %3, %40, %cst_31 {dimension_numbers = #tpu.dot_dimension_numbers<[1], [0], [0], [1], [0, 0, 1, 1], [], []>} : vector<16x16xf32>, vector<16x128xf32>, vector<16x128xf32> -> vector<16x128xf32>
    %cst_32 = arith.constant dense<0.000000e+00> : vector<16x128xf32>
    %44 = tpu.matmul %9, %41, %cst_32 {dimension_numbers = #tpu.dot_dimension_numbers<[1], [0], [0], [1], [0, 0, 1, 1], [], []>} : vector<16x16xf32>, vector<16x128xf32>, vector<16x128xf32> -> vector<16x128xf32>
    %45 = arith.subf %42, %43 : vector<16x128xf32>
    %46 = arith.subf %44, %42 : vector<16x128xf32>
    %47 = arith.subf %46, %43 : vector<16x128xf32>
    %48 = vector.extract_strided_slice %21 {offsets = [16, 0], sizes = [16, 128], strides = [1, 1]} : vector<64x128xf32> to vector<16x128xf32>
    %49 = vector.extract_strided_slice %23 {offsets = [16, 0], sizes = [16, 128], strides = [1, 1]} : vector<64x128xf32> to vector<16x128xf32>
    %50 = arith.addf %48, %49 : vector<16x128xf32>
    %cst_33 = arith.constant dense<0.000000e+00> : vector<16x128xf32>
    %51 = tpu.matmul %0, %48, %cst_33 {dimension_numbers = #tpu.dot_dimension_numbers<[1], [0], [0], [1], [0, 0, 1, 1], [], []>} : vector<16x16xf32>, vector<16x128xf32>, vector<16x128xf32> -> vector<16x128xf32>
    %cst_34 = arith.constant dense<0.000000e+00> : vector<16x128xf32>
    %52 = tpu.matmul %1, %49, %cst_34 {dimension_numbers = #tpu.dot_dimension_numbers<[1], [0], [0], [1], [0, 0, 1, 1], [], []>} : vector<16x16xf32>, vector<16x128xf32>, vector<16x128xf32> -> vector<16x128xf32>
    %cst_35 = arith.constant dense<0.000000e+00> : vector<16x128xf32>
    %53 = tpu.matmul %8, %50, %cst_35 {dimension_numbers = #tpu.dot_dimension_numbers<[1], [0], [0], [1], [0, 0, 1, 1], [], []>} : vector<16x16xf32>, vector<16x128xf32>, vector<16x128xf32> -> vector<16x128xf32>
    %54 = arith.subf %51, %52 : vector<16x128xf32>
    %55 = arith.subf %53, %51 : vector<16x128xf32>
    %56 = arith.subf %55, %52 : vector<16x128xf32>
    %57 = vector.extract_strided_slice %15 {offsets = [16, 0], sizes = [16, 128], strides = [1, 1]} : vector<64x128xf32> to vector<16x128xf32>
    %58 = arith.subf %57, %54 : vector<16x128xf32>
    %59 = arith.mulf %12, %58 : vector<16x128xf32>
    %60 = arith.addf %54, %59 : vector<16x128xf32>
    %61 = vector.extract_strided_slice %16 {offsets = [16, 0], sizes = [16, 128], strides = [1, 1]} : vector<64x128xf32> to vector<16x128xf32>
    %62 = arith.subf %61, %56 : vector<16x128xf32>
    %63 = arith.mulf %12, %62 : vector<16x128xf32>
    %64 = arith.addf %56, %63 : vector<16x128xf32>
    %65 = arith.addf %60, %64 : vector<16x128xf32>
    %cst_36 = arith.constant dense<0.000000e+00> : vector<16x128xf32>
    %66 = tpu.matmul %2, %60, %cst_36 {dimension_numbers = #tpu.dot_dimension_numbers<[1], [0], [0], [1], [0, 0, 1, 1], [], []>} : vector<16x16xf32>, vector<16x128xf32>, vector<16x128xf32> -> vector<16x128xf32>
    %cst_37 = arith.constant dense<0.000000e+00> : vector<16x128xf32>
    %67 = tpu.matmul %3, %64, %cst_37 {dimension_numbers = #tpu.dot_dimension_numbers<[1], [0], [0], [1], [0, 0, 1, 1], [], []>} : vector<16x16xf32>, vector<16x128xf32>, vector<16x128xf32> -> vector<16x128xf32>
    %cst_38 = arith.constant dense<0.000000e+00> : vector<16x128xf32>
    %68 = tpu.matmul %9, %65, %cst_38 {dimension_numbers = #tpu.dot_dimension_numbers<[1], [0], [0], [1], [0, 0, 1, 1], [], []>} : vector<16x16xf32>, vector<16x128xf32>, vector<16x128xf32> -> vector<16x128xf32>
    %69 = arith.subf %66, %67 : vector<16x128xf32>
    %70 = arith.subf %68, %66 : vector<16x128xf32>
    %71 = arith.subf %70, %67 : vector<16x128xf32>
    %72 = vector.extract_strided_slice %21 {offsets = [32, 0], sizes = [16, 128], strides = [1, 1]} : vector<64x128xf32> to vector<16x128xf32>
    %73 = vector.extract_strided_slice %23 {offsets = [32, 0], sizes = [16, 128], strides = [1, 1]} : vector<64x128xf32> to vector<16x128xf32>
    %74 = arith.addf %72, %73 : vector<16x128xf32>
    %cst_39 = arith.constant dense<0.000000e+00> : vector<16x128xf32>
    %75 = tpu.matmul %0, %72, %cst_39 {dimension_numbers = #tpu.dot_dimension_numbers<[1], [0], [0], [1], [0, 0, 1, 1], [], []>} : vector<16x16xf32>, vector<16x128xf32>, vector<16x128xf32> -> vector<16x128xf32>
    %cst_40 = arith.constant dense<0.000000e+00> : vector<16x128xf32>
    %76 = tpu.matmul %1, %73, %cst_40 {dimension_numbers = #tpu.dot_dimension_numbers<[1], [0], [0], [1], [0, 0, 1, 1], [], []>} : vector<16x16xf32>, vector<16x128xf32>, vector<16x128xf32> -> vector<16x128xf32>
    %cst_41 = arith.constant dense<0.000000e+00> : vector<16x128xf32>
    %77 = tpu.matmul %8, %74, %cst_41 {dimension_numbers = #tpu.dot_dimension_numbers<[1], [0], [0], [1], [0, 0, 1, 1], [], []>} : vector<16x16xf32>, vector<16x128xf32>, vector<16x128xf32> -> vector<16x128xf32>
    %78 = arith.subf %75, %76 : vector<16x128xf32>
    %79 = arith.subf %77, %75 : vector<16x128xf32>
    %80 = arith.subf %79, %76 : vector<16x128xf32>
    %81 = vector.extract_strided_slice %15 {offsets = [32, 0], sizes = [16, 128], strides = [1, 1]} : vector<64x128xf32> to vector<16x128xf32>
    %82 = arith.subf %81, %78 : vector<16x128xf32>
    %83 = arith.mulf %12, %82 : vector<16x128xf32>
    %84 = arith.addf %78, %83 : vector<16x128xf32>
    %85 = vector.extract_strided_slice %16 {offsets = [32, 0], sizes = [16, 128], strides = [1, 1]} : vector<64x128xf32> to vector<16x128xf32>
    %86 = arith.subf %85, %80 : vector<16x128xf32>
    %87 = arith.mulf %12, %86 : vector<16x128xf32>
    %88 = arith.addf %80, %87 : vector<16x128xf32>
    %89 = arith.addf %84, %88 : vector<16x128xf32>
    %cst_42 = arith.constant dense<0.000000e+00> : vector<16x128xf32>
    %90 = tpu.matmul %2, %84, %cst_42 {dimension_numbers = #tpu.dot_dimension_numbers<[1], [0], [0], [1], [0, 0, 1, 1], [], []>} : vector<16x16xf32>, vector<16x128xf32>, vector<16x128xf32> -> vector<16x128xf32>
    %cst_43 = arith.constant dense<0.000000e+00> : vector<16x128xf32>
    %91 = tpu.matmul %3, %88, %cst_43 {dimension_numbers = #tpu.dot_dimension_numbers<[1], [0], [0], [1], [0, 0, 1, 1], [], []>} : vector<16x16xf32>, vector<16x128xf32>, vector<16x128xf32> -> vector<16x128xf32>
    %cst_44 = arith.constant dense<0.000000e+00> : vector<16x128xf32>
    %92 = tpu.matmul %9, %89, %cst_44 {dimension_numbers = #tpu.dot_dimension_numbers<[1], [0], [0], [1], [0, 0, 1, 1], [], []>} : vector<16x16xf32>, vector<16x128xf32>, vector<16x128xf32> -> vector<16x128xf32>
    %93 = arith.subf %90, %91 : vector<16x128xf32>
    %94 = arith.subf %92, %90 : vector<16x128xf32>
    %95 = arith.subf %94, %91 : vector<16x128xf32>
    %96 = vector.extract_strided_slice %21 {offsets = [48, 0], sizes = [16, 128], strides = [1, 1]} : vector<64x128xf32> to vector<16x128xf32>
    %97 = vector.extract_strided_slice %23 {offsets = [48, 0], sizes = [16, 128], strides = [1, 1]} : vector<64x128xf32> to vector<16x128xf32>
    %98 = arith.addf %96, %97 : vector<16x128xf32>
    %cst_45 = arith.constant dense<0.000000e+00> : vector<16x128xf32>
    %99 = tpu.matmul %0, %96, %cst_45 {dimension_numbers = #tpu.dot_dimension_numbers<[1], [0], [0], [1], [0, 0, 1, 1], [], []>} : vector<16x16xf32>, vector<16x128xf32>, vector<16x128xf32> -> vector<16x128xf32>
    %cst_46 = arith.constant dense<0.000000e+00> : vector<16x128xf32>
    %100 = tpu.matmul %1, %97, %cst_46 {dimension_numbers = #tpu.dot_dimension_numbers<[1], [0], [0], [1], [0, 0, 1, 1], [], []>} : vector<16x16xf32>, vector<16x128xf32>, vector<16x128xf32> -> vector<16x128xf32>
    %cst_47 = arith.constant dense<0.000000e+00> : vector<16x128xf32>
    %101 = tpu.matmul %8, %98, %cst_47 {dimension_numbers = #tpu.dot_dimension_numbers<[1], [0], [0], [1], [0, 0, 1, 1], [], []>} : vector<16x16xf32>, vector<16x128xf32>, vector<16x128xf32> -> vector<16x128xf32>
    %102 = arith.subf %99, %100 : vector<16x128xf32>
    %103 = arith.subf %101, %99 : vector<16x128xf32>
    %104 = arith.subf %103, %100 : vector<16x128xf32>
    %105 = vector.extract_strided_slice %15 {offsets = [48, 0], sizes = [16, 128], strides = [1, 1]} : vector<64x128xf32> to vector<16x128xf32>
    %106 = arith.subf %105, %102 : vector<16x128xf32>
    %107 = arith.mulf %12, %106 : vector<16x128xf32>
    %108 = arith.addf %102, %107 : vector<16x128xf32>
    %109 = vector.extract_strided_slice %16 {offsets = [48, 0], sizes = [16, 128], strides = [1, 1]} : vector<64x128xf32> to vector<16x128xf32>
    %110 = arith.subf %109, %104 : vector<16x128xf32>
    %111 = arith.mulf %12, %110 : vector<16x128xf32>
    %112 = arith.addf %104, %111 : vector<16x128xf32>
    %113 = arith.addf %108, %112 : vector<16x128xf32>
    %cst_48 = arith.constant dense<0.000000e+00> : vector<16x128xf32>
    %114 = tpu.matmul %2, %108, %cst_48 {dimension_numbers = #tpu.dot_dimension_numbers<[1], [0], [0], [1], [0, 0, 1, 1], [], []>} : vector<16x16xf32>, vector<16x128xf32>, vector<16x128xf32> -> vector<16x128xf32>
    %cst_49 = arith.constant dense<0.000000e+00> : vector<16x128xf32>
    %115 = tpu.matmul %3, %112, %cst_49 {dimension_numbers = #tpu.dot_dimension_numbers<[1], [0], [0], [1], [0, 0, 1, 1], [], []>} : vector<16x16xf32>, vector<16x128xf32>, vector<16x128xf32> -> vector<16x128xf32>
    %cst_50 = arith.constant dense<0.000000e+00> : vector<16x128xf32>
    %116 = tpu.matmul %9, %113, %cst_50 {dimension_numbers = #tpu.dot_dimension_numbers<[1], [0], [0], [1], [0, 0, 1, 1], [], []>} : vector<16x16xf32>, vector<16x128xf32>, vector<16x128xf32> -> vector<16x128xf32>
    %117 = arith.subf %114, %115 : vector<16x128xf32>
    %118 = arith.subf %116, %114 : vector<16x128xf32>
    %119 = arith.subf %118, %115 : vector<16x128xf32>
    %120 = tpu.concatenate %45, %69, %93, %117 in 0 : vector<16x128xf32>, vector<16x128xf32>, vector<16x128xf32>, vector<16x128xf32> -> vector<64x128xf32>
    %121 = tpu.concatenate %47, %71, %95, %119 in 0 : vector<16x128xf32>, vector<16x128xf32>, vector<16x128xf32>, vector<16x128xf32> -> vector<64x128xf32>
    %122 = arith.addf %120, %121 : vector<64x128xf32>
    %cst_51 = arith.constant dense<0.000000e+00> : vector<64x128xf32>
    %123 = tpu.matmul %120, %6, %cst_51 {dimension_numbers = #tpu.dot_dimension_numbers<[1], [0], [0], [1], [0, 0, 1, 1], [], []>} : vector<64x128xf32>, vector<128x128xf32>, vector<64x128xf32> -> vector<64x128xf32>
    %cst_52 = arith.constant dense<0.000000e+00> : vector<64x128xf32>
    %124 = tpu.matmul %121, %7, %cst_52 {dimension_numbers = #tpu.dot_dimension_numbers<[1], [0], [0], [1], [0, 0, 1, 1], [], []>} : vector<64x128xf32>, vector<128x128xf32>, vector<64x128xf32> -> vector<64x128xf32>
    %cst_53 = arith.constant dense<0.000000e+00> : vector<64x128xf32>
    %125 = tpu.matmul %122, %11, %cst_53 {dimension_numbers = #tpu.dot_dimension_numbers<[1], [0], [0], [1], [0, 0, 1, 1], [], []>} : vector<64x128xf32>, vector<128x128xf32>, vector<64x128xf32> -> vector<64x128xf32>
    %126 = arith.subf %123, %124 : vector<64x128xf32>
    %127 = arith.subf %125, %123 : vector<64x128xf32>
    %128 = arith.subf %127, %124 : vector<64x128xf32>
    %c0_54 = arith.constant 0 : index
    %c0_55 = arith.constant 0 : index
    %129 = vector.load %arg14[%c0_54, %c0_55] : memref<64x128xf32, #tpu.memory_space<vmem>>, vector<64x128xf32>
    tpu.vector_store %arg14[%c0_54, %c0_55], %126 {strides = array<i32>} : memref<64x128xf32, #tpu.memory_space<vmem>>, vector<64x128xf32>,
    %c0_56 = arith.constant 0 : index
    %c0_57 = arith.constant 0 : index
    %130 = vector.load %arg15[%c0_56, %c0_57] : memref<64x128xf32, #tpu.memory_space<vmem>>, vector<64x128xf32>
    tpu.vector_store %arg15[%c0_56, %c0_57], %128 {strides = array<i32>} : memref<64x128xf32, #tpu.memory_space<vmem>>, vector<64x128xf32>,
    return
  }
  func.func @transform_0(%arg0: i32) -> (i32, i32) {
    %c0_i32 = arith.constant 0 : i32
    %c0_i32_0 = arith.constant 0 : i32
    %c0_i32_1 = arith.constant 0 : i32
    return %c0_i32, %c0_i32_0 : i32, i32
  }
  func.func @transform_1(%arg0: i32) -> (i32, i32) {
    %c0_i32 = arith.constant 0 : i32
    %c0_i32_0 = arith.constant 0 : i32
    %c0_i32_1 = arith.constant 0 : i32
    return %c0_i32, %c0_i32_0 : i32, i32
  }
  func.func @transform_2(%arg0: i32) -> (i32, i32) {
    %c0_i32 = arith.constant 0 : i32
    %c0_i32_0 = arith.constant 0 : i32
    %c0_i32_1 = arith.constant 0 : i32
    return %c0_i32, %c0_i32_0 : i32, i32
  }
  func.func @transform_3(%arg0: i32) -> (i32, i32) {
    %c0_i32 = arith.constant 0 : i32
    %c0_i32_0 = arith.constant 0 : i32
    %c0_i32_1 = arith.constant 0 : i32
    return %c0_i32, %c0_i32_0 : i32, i32
  }
  func.func @transform_4(%arg0: i32) -> (i32, i32) {
    %c0_i32 = arith.constant 0 : i32
    %c0_i32_0 = arith.constant 0 : i32
    %c0_i32_1 = arith.constant 0 : i32
    return %c0_i32, %c0_i32_0 : i32, i32
  }
  func.func @transform_5(%arg0: i32) -> (i32, i32) {
    %c0_i32 = arith.constant 0 : i32
    %c0_i32_0 = arith.constant 0 : i32
    %c0_i32_1 = arith.constant 0 : i32
    return %c0_i32, %c0_i32_0 : i32, i32
  }
  func.func @transform_6(%arg0: i32) -> (i32, i32) {
    %c0_i32 = arith.constant 0 : i32
    %c0_i32_0 = arith.constant 0 : i32
    %c0_i32_1 = arith.constant 0 : i32
    return %c0_i32, %c0_i32_0 : i32, i32
  }
  func.func @transform_7(%arg0: i32) -> (i32, i32) {
    %c0_i32 = arith.constant 0 : i32
    %c0_i32_0 = arith.constant 0 : i32
    %c0_i32_1 = arith.constant 0 : i32
    return %c0_i32, %c0_i32_0 : i32, i32
  }
  func.func @transform_8(%arg0: i32) -> (i32, i32) {
    %c0_i32 = arith.constant 0 : i32
    %c0_i32_0 = arith.constant 0 : i32
    %c0_i32_1 = arith.constant 0 : i32
    return %c0_i32, %c0_i32_0 : i32, i32
  }
  func.func @transform_9(%arg0: i32) -> (i32, i32) {
    %c0_i32 = arith.constant 0 : i32
    %c0_i32_0 = arith.constant 0 : i32
    return %arg0, %c0_i32 : i32, i32
  }
  func.func @transform_10(%arg0: i32) -> (i32, i32) {
    %c0_i32 = arith.constant 0 : i32
    %c0_i32_0 = arith.constant 0 : i32
    return %arg0, %c0_i32 : i32, i32
  }
  func.func @transform_11(%arg0: i32) -> (i32, i32) {
    %c0_i32 = arith.constant 0 : i32
    %c0_i32_0 = arith.constant 0 : i32
    return %arg0, %c0_i32 : i32, i32
  }
  func.func @transform_12(%arg0: i32) -> (i32, i32) {
    %c0_i32 = arith.constant 0 : i32
    %c0_i32_0 = arith.constant 0 : i32
    return %arg0, %c0_i32 : i32, i32
  }
  func.func @transform_13(%arg0: i32) -> (i32, i32) {
    %c0_i32 = arith.constant 0 : i32
    %c0_i32_0 = arith.constant 0 : i32
    return %arg0, %c0_i32 : i32, i32
  }
  func.func @transform_14(%arg0: i32) -> (i32, i32) {
    %c0_i32 = arith.constant 0 : i32
    %c0_i32_0 = arith.constant 0 : i32
    return %arg0, %c0_i32 : i32, i32
  }
}

</mosaic_0001>

<llo_original>
// kernel: tpu_custom_call.1
$region0: #{tpu_custom_call.1}
  #allocation0 [shape = 'u32[]', space=smem, size = 0x4, offset = 0x4, fixed_abs, tag = 'smem constant byte address 0x4 - core index']
  #allocation1 [shape = 'u32[72,128]{1,0:T(1,128)}', space=vmem, size = 0x9000, scoped, tag = 'internal scratch']
  %s0 = inlined_call_operand.hbm [shape: f32[16,16], index: 0, kind: input, shape index: {}]
  %s1 = inlined_call_operand.hbm [shape: f32[16,16], index: 1, kind: input, shape index: {}]
  %s2 = inlined_call_operand.hbm [shape: f32[16,16], index: 2, kind: input, shape index: {}]
  %s3 = inlined_call_operand.hbm [shape: f32[16,16], index: 3, kind: input, shape index: {}]
  %s4 = inlined_call_operand.hbm [shape: f32[128,128], index: 4, kind: input, shape index: {}]
  %s5 = inlined_call_operand.hbm [shape: f32[128,128], index: 5, kind: input, shape index: {}]
  %s6 = inlined_call_operand.hbm [shape: f32[128,128], index: 6, kind: input, shape index: {}]
  %s7 = inlined_call_operand.hbm [shape: f32[128,128], index: 7, kind: input, shape index: {}]
  %s8 = inlined_call_operand.hbm [shape: f32[16,128], index: 8, kind: input, shape index: {}]
  %s9 = inlined_call_operand.hbm [shape: f32[128,128], index: 9, kind: input, shape index: {}]
  %s10 = inlined_call_operand.hbm [shape: f32[128,128], index: 10, kind: input, shape index: {}]
  %s11 = inlined_call_operand.hbm [shape: f32[128,128], index: 11, kind: input, shape index: {}]
  %s12 = inlined_call_operand.hbm [shape: f32[128,128], index: 12, kind: input, shape index: {}]
  %s13 = inlined_call_operand.hbm [shape: f32[128,128], index: 13, kind: output, shape index: {0}]
  %s14 = inlined_call_operand.hbm [shape: f32[128,128], index: 14, kind: output, shape index: {1}]
  %15 = xla_tuple %s13, %s14
  %s16 = sld [smem:[#allocation0]]
  $region145: #{tpu_custom_call.1} parent=0
    _
  %s18 = ssub.s32 1, %s16
  %s19 = scalar_select 0, %s18, %s16
  $region1: #{tpu_custom_call.1} parent=0
    #allocation2 [shape = 'u8[8192]{0}', space=vmem, size = 0x2000, scoped, tag = 'input window, operand 0, single buffered']
    #allocation3 [shape = 's32[2]{0}', space=sflag, size = 0x8, scoped, tag = 'scoped memory for tpu_custom_call.1']
    #allocation4 [shape = 's32[2]{0}', space=sflag, size = 0x8, scoped, tag = 'scoped memory for tpu_custom_call.1']
    #allocation5 [shape = 'u8[8192]{0}', space=vmem, size = 0x2000, scoped, tag = 'input window, operand 1, single buffered']
    #allocation6 [shape = 's32[1]{0}', space=sflag, size = 0x4, scoped, tag = 'scoped memory for tpu_custom_call.1']
    #allocation7 [shape = 'u8[8192]{0}', space=vmem, size = 0x2000, scoped, tag = 'input window, operand 2, single buffered']
    #allocation8 [shape = 'u8[8192]{0}', space=vmem, size = 0x2000, scoped, tag = 'input window, operand 3, single buffered']
    #allocation9 [shape = 's32[1]{0}', space=sflag, size = 0x4, scoped, tag = 'scoped memory for tpu_custom_call.1']
    #allocation10 [shape = 'u8[65536]{0}', space=vmem, size = 0x10000, scoped, tag = 'input window, operand 4, single buffered']
    #allocation11 [shape = 'u8[65536]{0}', space=vmem, size = 0x10000, scoped, tag = 'input window, operand 5, single buffered']
    #allocation12 [shape = 's32[1]{0}', space=sflag, size = 0x4, scoped, tag = 'scoped memory for tpu_custom_call.1']
    #allocation13 [shape = 'u8[65536]{0}', space=vmem, size = 0x10000, scoped, tag = 'input window, operand 6, single buffered']
    #allocation14 [shape = 'u8[65536]{0}', space=vmem, size = 0x10000, scoped, tag = 'input window, operand 7, single buffered']
    #allocation15 [shape = 's32[1]{0}', space=sflag, size = 0x4, scoped, tag = 'scoped memory for tpu_custom_call.1']
    #allocation16 [shape = 'u8[8192]{0}', space=vmem, size = 0x2000, scoped, tag = 'input window, operand 8, single buffered']
    #allocation17 [shape = 'u8[65536]{0}', space=vmem, size = 0x10000, scoped, tag = 'input window, operand 9']
    #allocation18 [shape = 's32[2]{0}', space=sflag, size = 0x8, scoped, tag = 'scoped memory for tpu_custom_call.1']
    #allocation19 [shape = 'u8[65536]{0}', space=vmem, size = 0x10000, scoped, tag = 'input window, operand 10']
    #allocation20 [shape = 'u8[65536]{0}', space=vmem, size = 0x10000, scoped, tag = 'input window, operand 11']
    #allocation21 [shape = 's32[2]{0}', space=sflag, size = 0x8, scoped, tag = 'scoped memory for tpu_custom_call.1']
    #allocation22 [shape = 'u8[65536]{0}', space=vmem, size = 0x10000, scoped, tag = 'input window, operand 12']
    #allocation23 [shape = 'u8[65536]{0}', space=vmem, size = 0x10000, scoped, tag = 'output window, operand 0']
    #allocation24 [shape = 'u8[65536]{0}', space=vmem, size = 0x10000, scoped, tag = 'output window, operand 1']
    #allocation25 [shape = 's32[2]{0}', space=sflag, size = 0x8, scoped, tag = 'scoped memory for tpu_custom_call.1']
    %20 = vsyncpa [#allocation3], 0
    %21 = vsyncpa [#allocation6], 0
    %22 = vsyncpa [#allocation9], 0
    %23 = vsyncpa [#allocation12], 0
    %24 = vsyncpa [#allocation15], 0
    %25 = vsyncpa [#allocation18], 0
    %s26 = scalar_lea.sflag [#allocation18], 1
    %27 = vsyncpa %s26, 0
    %28 = vsyncpa [#allocation21], 0
    %s29 = scalar_lea.sflag [#allocation21], 1
    %30 = vsyncpa %s29, 0
    %31 = vsyncpa [#allocation4], 0
    %s32 = scalar_lea.sflag [#allocation4], 1
    %33 = vsyncpa %s32, 0
    %34 = vsyncpa [#allocation25], 0
    %s35 = scalar_lea.sflag [#allocation25], 1
    %36 = vsyncpa %s35, 0
    loop: start=0, step=1, limit=4
    $region2: #{tpu_custom_call.1} parent=1 // loop_pre_header
      _
    $region3: #{tpu_custom_call.1} parent=1 // loop_header
      %s38 = sphi 0, %s42
      %p39 = scmp.ge.s32.totalorder %s38, 4
      %s46 = sphi 0, %s46
      %s48 = sphi 0, %s46
      %s49 = sphi 0, %s48
      %s63 = sphi 0, %s49
      %s67 = sphi 0, %s67
      %s69 = sphi 0, %s67
      %s70 = sphi 0, %s69
      %s84 = sphi 0, %s70
      %s88 = sphi 0, %s88
      %s90 = sphi 0, %s88
      %s91 = sphi 0, %s90
      %s105 = sphi 0, %s91
      %s109 = sphi 0, %s109
      %s111 = sphi 0, %s109
      %s112 = sphi 0, %s111
      %s126 = sphi 0, %s112
      %s130 = sphi 0, %s130
      %s132 = sphi 0, %s130
      %s133 = sphi 0, %s132
      %s147 = sphi 0, %s133
      %s151 = sphi 0, %s151
      %s153 = sphi 0, %s151
      %s154 = sphi 0, %s153
      %s168 = sphi 0, %s154
      %s172 = sphi 0, %s172
      %s174 = sphi 0, %s172
      %s175 = sphi 0, %s174
      %s189 = sphi 0, %s175
      %s193 = sphi 0, %s193
      %s195 = sphi 0, %s193
      %s196 = sphi 0, %s195
      %s210 = sphi 0, %s196
      %s214 = sphi 0, %s214
      %s216 = sphi 0, %s214
      %s217 = sphi 0, %s216
      %s231 = sphi 0, %s217
      %s237 = sphi 0, %s239
      %s240 = sphi 0, %s237
      %s241 = sphi 0, %s240
      %s257 = sphi 0, %s241
      %s263 = sphi 0, %s265
      %s266 = sphi 0, %s263
      %s267 = sphi 0, %s266
      %s283 = sphi 0, %s267
      %s289 = sphi 0, %s291
      %s292 = sphi 0, %s289
      %s293 = sphi 0, %s292
      %s309 = sphi 0, %s293
      %s315 = sphi 0, %s317
      %s318 = sphi 0, %s315
      %s319 = sphi 0, %s318
      %s335 = sphi 0, %s319
      %s341 = sphi 0, %s343
      %s344 = sphi 0, %s341
      %s345 = sphi 0, %s344
      %s361 = sphi 0, %s345
      %s367 = sphi 0, %s369
      %s370 = sphi 0, %s367
      %s371 = sphi 0, %s370
      %s387 = sphi 0, %s371
    $region4: #{tpu_custom_call.1} parent=1 // loop_header_branch
      %41 = sbr.rel (%p39) target = $region8
    $region5: #{tpu_custom_call.1} parent=1 // loop_body
      %s43 = ssub.s32 %s38, 1
      %s44 = ssub.s32 %s38, 2
      %s45 = sadd.s32 %s38, 1
      %s47 = sadd.s32 %s46, 1
      %p50 = scmp.eq.s32.totalorder %s38, 1
      %p51 = scmp.ne.s32.totalorder %s46, %s48
      %p52 = scmp.eq.s32.totalorder %s38, 0
      %p53 = por %p51, %p52
      %p54 = scmp.ne.s32.totalorder %s46, %s48
      %p55 = scmp.eq.s32.totalorder %s43, 1
      %p56 = por %p54, %p55
      %p57 = scmp.ne.s32.totalorder %s48, %s49
      %p58 = scmp.eq.s32.totalorder %s43, 0
      %p59 = por %p57, %p58
      %p60 = scmp.ne.s32.totalorder %s48, %s49
      %p61 = scmp.eq.s32.totalorder %s44, 1
      %p62 = por %p60, %p61
      %p64 = scmp.ne.s32.totalorder %s49, %s63
      %p65 = scmp.eq.s32.totalorder %s44, 0
      %p66 = por %p64, %p65
      %s68 = sadd.s32 %s67, 1
      %p71 = scmp.eq.s32.totalorder %s38, 1
      %p72 = scmp.ne.s32.totalorder %s67, %s69
      %p73 = scmp.eq.s32.totalorder %s38, 0
      %p74 = por %p72, %p73
      %p75 = scmp.ne.s32.totalorder %s67, %s69
      %p76 = scmp.eq.s32.totalorder %s43, 1
      %p77 = por %p75, %p76
      %p78 = scmp.ne.s32.totalorder %s69, %s70
      %p79 = scmp.eq.s32.totalorder %s43, 0
      %p80 = por %p78, %p79
      %p81 = scmp.ne.s32.totalorder %s69, %s70
      %p82 = scmp.eq.s32.totalorder %s44, 1
      %p83 = por %p81, %p82
      %p85 = scmp.ne.s32.totalorder %s70, %s84
      %p86 = scmp.eq.s32.totalorder %s44, 0
      %p87 = por %p85, %p86
      %s89 = sadd.s32 %s88, 1
      %p92 = scmp.eq.s32.totalorder %s38, 1
      %p93 = scmp.ne.s32.totalorder %s88, %s90
      %p94 = scmp.eq.s32.totalorder %s38, 0
      %p95 = por %p93, %p94
      %p96 = scmp.ne.s32.totalorder %s88, %s90
      %p97 = scmp.eq.s32.totalorder %s43, 1
      %p98 = por %p96, %p97
      %p99 = scmp.ne.s32.totalorder %s90, %s91
      %p100 = scmp.eq.s32.totalorder %s43, 0
      %p101 = por %p99, %p100
      %p102 = scmp.ne.s32.totalorder %s90, %s91
      %p103 = scmp.eq.s32.totalorder %s44, 1
      %p104 = por %p102, %p103
      %p106 = scmp.ne.s32.totalorder %s91, %s105
      %p107 = scmp.eq.s32.totalorder %s44, 0
      %p108 = por %p106, %p107
      %s110 = sadd.s32 %s109, 1
      %p113 = scmp.eq.s32.totalorder %s38, 1
      %p114 = scmp.ne.s32.totalorder %s109, %s111
      %p115 = scmp.eq.s32.totalorder %s38, 0
      %p116 = por %p114, %p115
      %p117 = scmp.ne.s32.totalorder %s109, %s111
      %p118 = scmp.eq.s32.totalorder %s43, 1
      %p119 = por %p117, %p118
      %p120 = scmp.ne.s32.totalorder %s111, %s112
      %p121 = scmp.eq.s32.totalorder %s43, 0
      %p122 = por %p120, %p121
      %p123 = scmp.ne.s32.totalorder %s111, %s112
      %p124 = scmp.eq.s32.totalorder %s44, 1
      %p125 = por %p123, %p124
      %p127 = scmp.ne.s32.totalorder %s112, %s126
      %p128 = scmp.eq.s32.totalorder %s44, 0
      %p129 = por %p127, %p128
      %s131 = sadd.s32 %s130, 1
      %p134 = scmp.eq.s32.totalorder %s38, 1
      %p135 = scmp.ne.s32.totalorder %s130, %s132
      %p136 = scmp.eq.s32.totalorder %s38, 0
      %p137 = por %p135, %p136
      %p138 = scmp.ne.s32.totalorder %s130, %s132
      %p139 = scmp.eq.s32.totalorder %s43, 1
      %p140 = por %p138, %p139
      %p141 = scmp.ne.s32.totalorder %s132, %s133
      %p142 = scmp.eq.s32.totalorder %s43, 0
      %p143 = por %p141, %p142
      %p144 = scmp.ne.s32.totalorder %s132, %s133
      %p145 = scmp.eq.s32.totalorder %s44, 1
      %p146 = por %p144, %p145
      %p148 = scmp.ne.s32.totalorder %s133, %s147
      %p149 = scmp.eq.s32.totalorder %s44, 0
      %p150 = por %p148, %p149
      %s152 = sadd.s32 %s151, 1
      %p155 = scmp.eq.s32.totalorder %s38, 1
      %p156 = scmp.ne.s32.totalorder %s151, %s153
      %p157 = scmp.eq.s32.totalorder %s38, 0
      %p158 = por %p156, %p157
      %p159 = scmp.ne.s32.totalorder %s151, %s153
      %p160 = scmp.eq.s32.totalorder %s43, 1
      %p161 = por %p159, %p160
      %p162 = scmp.ne.s32.totalorder %s153, %s154
      %p163 = scmp.eq.s32.totalorder %s43, 0
      %p164 = por %p162, %p163
      %p165 = scmp.ne.s32.totalorder %s153, %s154
      %p166 = scmp.eq.s32.totalorder %s44, 1
      %p167 = por %p165, %p166
      %p169 = scmp.ne.s32.totalorder %s154, %s168
      %p170 = scmp.eq.s32.totalorder %s44, 0
      %p171 = por %p169, %p170
      %s173 = sadd.s32 %s172, 1
      %p176 = scmp.eq.s32.totalorder %s38, 1
      %p177 = scmp.ne.s32.totalorder %s172, %s174
      %p178 = scmp.eq.s32.totalorder %s38, 0
      %p179 = por %p177, %p178
      %p180 = scmp.ne.s32.totalorder %s172, %s174
      %p181 = scmp.eq.s32.totalorder %s43, 1
      %p182 = por %p180, %p181
      %p183 = scmp.ne.s32.totalorder %s174, %s175
      %p184 = scmp.eq.s32.totalorder %s43, 0
      %p185 = por %p183, %p184
      %p186 = scmp.ne.s32.totalorder %s174, %s175
      %p187 = scmp.eq.s32.totalorder %s44, 1
      %p188 = por %p186, %p187
      %p190 = scmp.ne.s32.totalorder %s175, %s189
      %p191 = scmp.eq.s32.totalorder %s44, 0
      %p192 = por %p190, %p191
      %s194 = sadd.s32 %s193, 1
      %p197 = scmp.eq.s32.totalorder %s38, 1
      %p198 = scmp.ne.s32.totalorder %s193, %s195
      %p199 = scmp.eq.s32.totalorder %s38, 0
      %p200 = por %p198, %p199
      %p201 = scmp.ne.s32.totalorder %s193, %s195
      %p202 = scmp.eq.s32.totalorder %s43, 1
      %p203 = por %p201, %p202
      %p204 = scmp.ne.s32.totalorder %s195, %s196
      %p205 = scmp.eq.s32.totalorder %s43, 0
      %p206 = por %p204, %p205
      %p207 = scmp.ne.s32.totalorder %s195, %s196
      %p208 = scmp.eq.s32.totalorder %s44, 1
      %p209 = por %p207, %p208
      %p211 = scmp.ne.s32.totalorder %s196, %s210
      %p212 = scmp.eq.s32.totalorder %s44, 0
      %p213 = por %p211, %p212
      %s215 = sadd.s32 %s214, 1
      %p218 = scmp.eq.s32.totalorder %s38, 1
      %p219 = scmp.ne.s32.totalorder %s214, %s216
      %p220 = scmp.eq.s32.totalorder %s38, 0
      %p221 = por %p219, %p220
      %p222 = scmp.ne.s32.totalorder %s214, %s216
      %p223 = scmp.eq.s32.totalorder %s43, 1
      %p224 = por %p222, %p223
      %p225 = scmp.ne.s32.totalorder %s216, %s217
      %p226 = scmp.eq.s32.totalorder %s43, 0
      %p227 = por %p225, %p226
      %p228 = scmp.ne.s32.totalorder %s216, %s217
      %p229 = scmp.eq.s32.totalorder %s44, 1
      %p230 = por %p228, %p229
      %p232 = scmp.ne.s32.totalorder %s217, %s231
      %p233 = scmp.eq.s32.totalorder %s44, 0
      %p234 = por %p232, %p233
      %s235 = ssub.s32 %s38, %s45
      %p236 = scmp.eq.s32.totalorder %s235, 0
      %s238 = sadd.s32 %s237, 1
      %s239 = scalar_select %p236, %s237, %s238
      %p242 = pneg %p236
      %p243 = scmp.eq.s32.totalorder %s38, 1
      %p244 = por %p242, %p243
      %p245 = scmp.ne.s32.totalorder %s237, %s240
      %p246 = scmp.eq.s32.totalorder %s38, 0
      %p247 = por %p245, %p246
      %p248 = scmp.ne.s32.totalorder %s237, %s240
      %p249 = scmp.eq.s32.totalorder %s43, 1
      %p250 = por %p248, %p249
      %p251 = scmp.ne.s32.totalorder %s240, %s241
      %p252 = scmp.eq.s32.totalorder %s43, 0
      %p253 = por %p251, %p252
      %p254 = scmp.ne.s32.totalorder %s240, %s241
      %p255 = scmp.eq.s32.totalorder %s44, 1
      %p256 = por %p254, %p255
      %p258 = scmp.ne.s32.totalorder %s241, %s257
      %p259 = scmp.eq.s32.totalorder %s44, 0
      %p260 = por %p258, %p259
      %s261 = ssub.s32 %s38, %s45
      %p262 = scmp.eq.s32.totalorder %s261, 0
      %s264 = sadd.s32 %s263, 1
      %s265 = scalar_select %p262, %s263, %s264
      %p268 = pneg %p262
      %p269 = scmp.eq.s32.totalorder %s38, 1
      %p270 = por %p268, %p269
      %p271 = scmp.ne.s32.totalorder %s263, %s266
      %p272 = scmp.eq.s32.totalorder %s38, 0
      %p273 = por %p271, %p272
      %p274 = scmp.ne.s32.totalorder %s263, %s266
      %p275 = scmp.eq.s32.totalorder %s43, 1
      %p276 = por %p274, %p275
      %p277 = scmp.ne.s32.totalorder %s266, %s267
      %p278 = scmp.eq.s32.totalorder %s43, 0
      %p279 = por %p277, %p278
      %p280 = scmp.ne.s32.totalorder %s266, %s267
      %p281 = scmp.eq.s32.totalorder %s44, 1
      %p282 = por %p280, %p281
      %p284 = scmp.ne.s32.totalorder %s267, %s283
      %p285 = scmp.eq.s32.totalorder %s44, 0
      %p286 = por %p284, %p285
      %s287 = ssub.s32 %s38, %s45
      %p288 = scmp.eq.s32.totalorder %s287, 0
      %s290 = sadd.s32 %s289, 1
      %s291 = scalar_select %p288, %s289, %s290
      %p294 = pneg %p288
      %p295 = scmp.eq.s32.totalorder %s38, 1
      %p296 = por %p294, %p295
      %p297 = scmp.ne.s32.totalorder %s289, %s292
      %p298 = scmp.eq.s32.totalorder %s38, 0
      %p299 = por %p297, %p298
      %p300 = scmp.ne.s32.totalorder %s289, %s292
      %p301 = scmp.eq.s32.totalorder %s43, 1
      %p302 = por %p300, %p301
      %p303 = scmp.ne.s32.totalorder %s292, %s293
      %p304 = scmp.eq.s32.totalorder %s43, 0
      %p305 = por %p303, %p304
      %p306 = scmp.ne.s32.totalorder %s292, %s293
      %p307 = scmp.eq.s32.totalorder %s44, 1
      %p308 = por %p306, %p307
      %p310 = scmp.ne.s32.totalorder %s293, %s309
      %p311 = scmp.eq.s32.totalorder %s44, 0
      %p312 = por %p310, %p311
      %s313 = ssub.s32 %s38, %s45
      %p314 = scmp.eq.s32.totalorder %s313, 0
      %s316 = sadd.s32 %s315, 1
      %s317 = scalar_select %p314, %s315, %s316
      %p320 = pneg %p314
      %p321 = scmp.eq.s32.totalorder %s38, 1
      %p322 = por %p320, %p321
      %p323 = scmp.ne.s32.totalorder %s315, %s318
      %p324 = scmp.eq.s32.totalorder %s38, 0
      %p325 = por %p323, %p324
      %p326 = scmp.ne.s32.totalorder %s315, %s318
      %p327 = scmp.eq.s32.totalorder %s43, 1
      %p328 = por %p326, %p327
      %p329 = scmp.ne.s32.totalorder %s318, %s319
      %p330 = scmp.eq.s32.totalorder %s43, 0
      %p331 = por %p329, %p330
      %p332 = scmp.ne.s32.totalorder %s318, %s319
      %p333 = scmp.eq.s32.totalorder %s44, 1
      %p334 = por %p332, %p333
      %p336 = scmp.ne.s32.totalorder %s319, %s335
      %p337 = scmp.eq.s32.totalorder %s44, 0
      %p338 = por %p336, %p337
      %s339 = ssub.s32 %s38, %s45
      %p340 = scmp.eq.s32.totalorder %s339, 0
      %s342 = sadd.s32 %s341, 1
      %s343 = scalar_select %p340, %s341, %s342
      %p346 = pneg %p340
      %p347 = scmp.eq.s32.totalorder %s38, 1
      %p348 = por %p346, %p347
      %p349 = scmp.ne.s32.totalorder %s341, %s344
      %p350 = scmp.eq.s32.totalorder %s38, 0
      %p351 = por %p349, %p350
      %p352 = scmp.ne.s32.totalorder %s341, %s344
      %p353 = scmp.eq.s32.totalorder %s43, 1
      %p354 = por %p352, %p353
      %p355 = scmp.ne.s32.totalorder %s344, %s345
      %p356 = scmp.eq.s32.totalorder %s43, 0
      %p357 = por %p355, %p356
      %p358 = scmp.ne.s32.totalorder %s344, %s345
      %p359 = scmp.eq.s32.totalorder %s44, 1
      %p360 = por %p358, %p359
      %p362 = scmp.ne.s32.totalorder %s345, %s361
      %p363 = scmp.eq.s32.totalorder %s44, 0
      %p364 = por %p362, %p363
      %s365 = ssub.s32 %s38, %s45
      %p366 = scmp.eq.s32.totalorder %s365, 0
      %s368 = sadd.s32 %s367, 1
      %s369 = scalar_select %p366, %s367, %s368
      %p372 = pneg %p366
      %p373 = scmp.eq.s32.totalorder %s38, 1
      %p374 = por %p372, %p373
      %p375 = scmp.ne.s32.totalorder %s367, %s370
      %p376 = scmp.eq.s32.totalorder %s38, 0
      %p377 = por %p375, %p376
      %p378 = scmp.ne.s32.totalorder %s367, %s370
      %p379 = scmp.eq.s32.totalorder %s43, 1
      %p380 = por %p378, %p379
      %p381 = scmp.ne.s32.totalorder %s370, %s371
      %p382 = scmp.eq.s32.totalorder %s43, 0
      %p383 = por %p381, %p382
      %p384 = scmp.ne.s32.totalorder %s370, %s371
      %p385 = scmp.eq.s32.totalorder %s44, 1
      %p386 = por %p384, %p385
      %p388 = scmp.ne.s32.totalorder %s371, %s387
      %p389 = scmp.eq.s32.totalorder %s44, 0
      %p390 = por %p388, %p389
      %p391 = scmp.le.s32.totalorder 1, %s38
      %p392 = scmp.lt.s32.totalorder %s38, 3
      %p393 = pnand %p391, %p392
      %p394 = pneg %p393
      // Predicated region
      $region9: #{tpu_custom_call.1} parent=5 // pred_check
        _
      $region10: #{tpu_custom_call.1} parent=5 // pred_check_branch
        %396 = sbr.rel (%p393) target = $region12
      $region11: #{tpu_custom_call.1} parent=5 // pred_region
        %s397 = ssub.s32 %s38, 1
        // Predicated region
        $region13: #{tpu_custom_call.1} parent=11 // pred_check
          %p398 = pneg %p59
        $region14: #{tpu_custom_call.1} parent=11 // pred_check_branch
          %400 = sbr.rel (%p398) target = $region16
        $region15: #{tpu_custom_call.1} parent=11 // pred_region
          %402 = vsyncadd [#allocation3], 0
          %s403 = sshll.u32 %s0, 4
          %s404 = int_to_ptr.hbm [resolvable:$true] %s403
          %s405 = sshll.u32 [#allocation2], 4
          %s406 = int_to_ptr.vmem [resolvable:$true] %s405
          %411 = dma.hbm_to_vmem [thread:$0]  %s404, 256, %s406, [#allocation3], 128, 128, 8
        $region16: #{tpu_custom_call.1} parent=11 // pred_fallthru
          _
        // Predicated region
        $region17: #{tpu_custom_call.1} parent=11 // pred_check
          %p412 = pneg %p80
        $region18: #{tpu_custom_call.1} parent=11 // pred_check_branch
          %414 = sbr.rel (%p412) target = $region20
        $region19: #{tpu_custom_call.1} parent=11 // pred_region
          %416 = vsyncadd [#allocation6], 0
          %s417 = sshll.u32 %s1, 4
          %s418 = int_to_ptr.hbm [resolvable:$true] %s417
          %s419 = sshll.u32 [#allocation5], 4
          %s420 = int_to_ptr.vmem [resolvable:$true] %s419
          %425 = dma.hbm_to_vmem [thread:$0]  %s418, 256, %s420, [#allocation6], 128, 128, 8
        $region20: #{tpu_custom_call.1} parent=11 // pred_fallthru
          _
        // Predicated region
        $region21: #{tpu_custom_call.1} parent=11 // pred_check
          %p426 = pneg %p101
        $region22: #{tpu_custom_call.1} parent=11 // pred_check_branch
          %428 = sbr.rel (%p426) target = $region24
        $region23: #{tpu_custom_call.1} parent=11 // pred_region
          %430 = vsyncadd [#allocation6], 0
          %s431 = sshll.u32 %s2, 4
          %s432 = int_to_ptr.hbm [resolvable:$true] %s431
          %s433 = sshll.u32 [#allocation7], 4
          %s434 = int_to_ptr.vmem [resolvable:$true] %s433
          %439 = dma.hbm_to_vmem [thread:$0]  %s432, 256, %s434, [#allocation6], 128, 128, 8
        $region24: #{tpu_custom_call.1} parent=11 // pred_fallthru
          _
        // Predicated region
        $region25: #{tpu_custom_call.1} parent=11 // pred_check
          %p440 = pneg %p122
        $region26: #{tpu_custom_call.1} parent=11 // pred_check_branch
          %442 = sbr.rel (%p440) target = $region28
        $region27: #{tpu_custom_call.1} parent=11 // pred_region
          %444 = vsyncadd [#allocation9], 0
          %s445 = sshll.u32 %s3, 4
          %s446 = int_to_ptr.hbm [resolvable:$true] %s445
          %s447 = sshll.u32 [#allocation8], 4
          %s448 = int_to_ptr.vmem [resolvable:$true] %s447
          %453 = dma.hbm_to_vmem [thread:$0]  %s446, 256, %s448, [#allocation9], 128, 128, 8
        $region28: #{tpu_custom_call.1} parent=11 // pred_fallthru
          _
        // Predicated region
        $region29: #{tpu_custom_call.1} parent=11 // pred_check
          %p454 = pneg %p143
        $region30: #{tpu_custom_call.1} parent=11 // pred_check_branch
          %456 = sbr.rel (%p454) target = $region32
        $region31: #{tpu_custom_call.1} parent=11 // pred_region
          %458 = vsyncadd [#allocation9], 0
          %s459 = sshll.u32 %s4, 4
          %s460 = int_to_ptr.hbm [resolvable:$true] %s459
          %s461 = sshll.u32 [#allocation10], 4
          %s462 = int_to_ptr.vmem [resolvable:$true] %s461
          %467 = dma.hbm_to_vmem [thread:$0]  %s460, 2048, %s462, [#allocation9], 128, 128, 8
        $region32: #{tpu_custom_call.1} parent=11 // pred_fallthru
          _
        // Predicated region
        $region33: #{tpu_custom_call.1} parent=11 // pred_check
          %p468 = pneg %p164
        $region34: #{tpu_custom_call.1} parent=11 // pred_check_branch
          %470 = sbr.rel (%p468) target = $region36
        $region35: #{tpu_custom_call.1} parent=11 // pred_region
          %472 = vsyncadd [#allocation12], 0
          %s473 = sshll.u32 %s5, 4
          %s474 = int_to_ptr.hbm [resolvable:$true] %s473
          %s475 = sshll.u32 [#allocation11], 4
          %s476 = int_to_ptr.vmem [resolvable:$true] %s475
          %481 = dma.hbm_to_vmem [thread:$0]  %s474, 2048, %s476, [#allocation12], 128, 128, 8
        $region36: #{tpu_custom_call.1} parent=11 // pred_fallthru
          _
        // Predicated region
        $region37: #{tpu_custom_call.1} parent=11 // pred_check
          %p482 = pneg %p185
        $region38: #{tpu_custom_call.1} parent=11 // pred_check_branch
          %484 = sbr.rel (%p482) target = $region40
        $region39: #{tpu_custom_call.1} parent=11 // pred_region
          %486 = vsyncadd [#allocation12], 0
          %s487 = sshll.u32 %s6, 4
          %s488 = int_to_ptr.hbm [resolvable:$true] %s487
          %s489 = sshll.u32 [#allocation13], 4
          %s490 = int_to_ptr.vmem [resolvable:$true] %s489
          %495 = dma.hbm_to_vmem [thread:$0]  %s488, 2048, %s490, [#allocation12], 128, 128, 8
        $region40: #{tpu_custom_call.1} parent=11 // pred_fallthru
          _
        // Predicated region
        $region41: #{tpu_custom_call.1} parent=11 // pred_check
          %p496 = pneg %p206
        $region42: #{tpu_custom_call.1} parent=11 // pred_check_branch
          %498 = sbr.rel (%p496) target = $region44
        $region43: #{tpu_custom_call.1} parent=11 // pred_region
          %500 = vsyncadd [#allocation15], 0
          %s501 = sshll.u32 %s7, 4
          %s502 = int_to_ptr.hbm [resolvable:$true] %s501
          %s503 = sshll.u32 [#allocation14], 4
          %s504 = int_to_ptr.vmem [resolvable:$true] %s503
          %509 = dma.hbm_to_vmem [thread:$0]  %s502, 2048, %s504, [#allocation15], 128, 128, 8
        $region44: #{tpu_custom_call.1} parent=11 // pred_fallthru
          _
        // Predicated region
        $region45: #{tpu_custom_call.1} parent=11 // pred_check
          %p510 = pneg %p227
        $region46: #{tpu_custom_call.1} parent=11 // pred_check_branch
          %512 = sbr.rel (%p510) target = $region48
        $region47: #{tpu_custom_call.1} parent=11 // pred_region
          %514 = vsyncadd [#allocation15], 0
          %s515 = sshll.u32 %s8, 4
          %s516 = int_to_ptr.hbm [resolvable:$true] %s515
          %s517 = sshll.u32 [#allocation16], 4
          %s518 = int_to_ptr.vmem [resolvable:$true] %s517
          %523 = dma.hbm_to_vmem [thread:$0]  %s516, 256, %s518, [#allocation15], 128, 128, 8
        $region48: #{tpu_custom_call.1} parent=11 // pred_fallthru
          _
      $region12: #{tpu_custom_call.1} parent=5 // pred_fallthru
        _
      %p524 = scmp.lt.s32.totalorder %s38, 2
      // Predicated region
      $region49: #{tpu_custom_call.1} parent=5 // pred_check
        %p525 = pneg %p524
      $region50: #{tpu_custom_call.1} parent=5 // pred_check_branch
        %527 = sbr.rel (%p525) target = $region52
      $region51: #{tpu_custom_call.1} parent=5 // pred_region
        // Predicated region
        $region53: #{tpu_custom_call.1} parent=51 // pred_check
          %p528 = pneg %p247
        $region54: #{tpu_custom_call.1} parent=51 // pred_check_branch
          %530 = sbr.rel (%p528) target = $region56
        $region55: #{tpu_custom_call.1} parent=51 // pred_region
          %s531 = sand.u32 %s38, 1
          %s532 = scalar_lea.sflag [#allocation18], %s531
          %s533 = sand.u32 %s237, 1
          %s534 = smul.addr %s533, 64
          %s535 = scalar_lea.vmem [#allocation17], %s534
          %s536 = smul.u32 8, %s38
          %538 = vsyncadd %s532, 0
          %s539 = smul.addr %s536, 8
          %s540 = scalar_lea.hbm %s9, %s539
          %s541 = sshll.u32 %s540, 4
          %s542 = int_to_ptr.hbm [resolvable:$true] %s541
          %s543 = sshll.u32 %s535, 4
          %s544 = int_to_ptr.vmem [resolvable:$true] %s543
          %549 = dma.hbm_to_vmem [thread:$0]  %s542, 1024, %s544, %s532, 128, 128, 8
        $region56: #{tpu_custom_call.1} parent=51 // pred_fallthru
          _
        // Predicated region
        $region57: #{tpu_custom_call.1} parent=51 // pred_check
          %p550 = pneg %p273
        $region58: #{tpu_custom_call.1} parent=51 // pred_check_branch
          %552 = sbr.rel (%p550) target = $region60
        $region59: #{tpu_custom_call.1} parent=51 // pred_region
          %s553 = sand.u32 %s38, 1
          %s554 = scalar_lea.sflag [#allocation18], %s553
          %s555 = sand.u32 %s263, 1
          %s556 = smul.addr %s555, 64
          %s557 = scalar_lea.vmem [#allocation19], %s556
          %s558 = smul.u32 8, %s38
          %560 = vsyncadd %s554, 0
          %s561 = smul.addr %s558, 8
          %s562 = scalar_lea.hbm %s10, %s561
          %s563 = sshll.u32 %s562, 4
          %s564 = int_to_ptr.hbm [resolvable:$true] %s563
          %s565 = sshll.u32 %s557, 4
          %s566 = int_to_ptr.vmem [resolvable:$true] %s565
          %571 = dma.hbm_to_vmem [thread:$0]  %s564, 1024, %s566, %s554, 128, 128, 8
        $region60: #{tpu_custom_call.1} parent=51 // pred_fallthru
          _
        // Predicated region
        $region61: #{tpu_custom_call.1} parent=51 // pred_check
          %p572 = pneg %p299
        $region62: #{tpu_custom_call.1} parent=51 // pred_check_branch
          %574 = sbr.rel (%p572) target = $region64
        $region63: #{tpu_custom_call.1} parent=51 // pred_region
          %s575 = sand.u32 %s38, 1
          %s576 = scalar_lea.sflag [#allocation21], %s575
          %s577 = sand.u32 %s289, 1
          %s578 = smul.addr %s577, 64
          %s579 = scalar_lea.vmem [#allocation20], %s578
          %s580 = smul.u32 8, %s38
          %582 = vsyncadd %s576, 0
          %s583 = smul.addr %s580, 8
          %s584 = scalar_lea.hbm %s11, %s583
          %s585 = sshll.u32 %s584, 4
          %s586 = int_to_ptr.hbm [resolvable:$true] %s585
          %s587 = sshll.u32 %s579, 4
          %s588 = int_to_ptr.vmem [resolvable:$true] %s587
          %593 = dma.hbm_to_vmem [thread:$0]  %s586, 1024, %s588, %s576, 128, 128, 8
        $region64: #{tpu_custom_call.1} parent=51 // pred_fallthru
          _
        // Predicated region
        $region65: #{tpu_custom_call.1} parent=51 // pred_check
          %p594 = pneg %p325
        $region66: #{tpu_custom_call.1} parent=51 // pred_check_branch
          %596 = sbr.rel (%p594) target = $region68
        $region67: #{tpu_custom_call.1} parent=51 // pred_region
          %s597 = sand.u32 %s38, 1
          %s598 = scalar_lea.sflag [#allocation21], %s597
          %s599 = sand.u32 %s315, 1
          %s600 = smul.addr %s599, 64
          %s601 = scalar_lea.vmem [#allocation22], %s600
          %s602 = smul.u32 8, %s38
          %604 = vsyncadd %s598, 0
          %s605 = smul.addr %s602, 8
          %s606 = scalar_lea.hbm %s12, %s605
          %s607 = sshll.u32 %s606, 4
          %s608 = int_to_ptr.hbm [resolvable:$true] %s607
          %s609 = sshll.u32 %s601, 4
          %s610 = int_to_ptr.vmem [resolvable:$true] %s609
          %615 = dma.hbm_to_vmem [thread:$0]  %s608, 1024, %s610, %s598, 128, 128, 8
        $region68: #{tpu_custom_call.1} parent=51 // pred_fallthru
          _
      $region52: #{tpu_custom_call.1} parent=5 // pred_fallthru
        _
      %p616 = scmp.le.s32.totalorder 1, %s38
      %p617 = scmp.lt.s32.totalorder %s38, 3
      %p618 = pnand %p616, %p617
      %p619 = pneg %p618
      // Predicated region
      $region69: #{tpu_custom_call.1} parent=5 // pred_check
        _
      $region70: #{tpu_custom_call.1} parent=5 // pred_check_branch
        %621 = sbr.rel (%p618) target = $region72
      $region71: #{tpu_custom_call.1} parent=5 // pred_region
        %s622 = ssub.s32 %s38, 1
        // Predicated region
        $region73: #{tpu_custom_call.1} parent=71 // pred_check
          %p623 = pneg %p59
        $region74: #{tpu_custom_call.1} parent=71 // pred_check_branch
          %625 = sbr.rel (%p623) target = $region76
        $region75: #{tpu_custom_call.1} parent=71 // pred_region
          %627 = dma.done [#allocation3], 256
        $region76: #{tpu_custom_call.1} parent=71 // pred_fallthru
          _
        // Predicated region
        $region77: #{tpu_custom_call.1} parent=71 // pred_check
          %p628 = pneg %p80
        $region78: #{tpu_custom_call.1} parent=71 // pred_check_branch
          %630 = sbr.rel (%p628) target = $region80
        $region79: #{tpu_custom_call.1} parent=71 // pred_region
          %632 = dma.done [#allocation6], 256
        $region80: #{tpu_custom_call.1} parent=71 // pred_fallthru
          _
        // Predicated region
        $region81: #{tpu_custom_call.1} parent=71 // pred_check
          %p633 = pneg %p101
        $region82: #{tpu_custom_call.1} parent=71 // pred_check_branch
          %635 = sbr.rel (%p633) target = $region84
        $region83: #{tpu_custom_call.1} parent=71 // pred_region
          %637 = dma.done [#allocation6], 256
        $region84: #{tpu_custom_call.1} parent=71 // pred_fallthru
          _
        // Predicated region
        $region85: #{tpu_custom_call.1} parent=71 // pred_check
          %p638 = pneg %p122
        $region86: #{tpu_custom_call.1} parent=71 // pred_check_branch
          %640 = sbr.rel (%p638) target = $region88
        $region87: #{tpu_custom_call.1} parent=71 // pred_region
          %642 = dma.done [#allocation9], 256
        $region88: #{tpu_custom_call.1} parent=71 // pred_fallthru
          _
        // Predicated region
        $region89: #{tpu_custom_call.1} parent=71 // pred_check
          %p643 = pneg %p143
        $region90: #{tpu_custom_call.1} parent=71 // pred_check_branch
          %645 = sbr.rel (%p643) target = $region92
        $region91: #{tpu_custom_call.1} parent=71 // pred_region
          %647 = dma.done [#allocation9], 2048
        $region92: #{tpu_custom_call.1} parent=71 // pred_fallthru
          _
        // Predicated region
        $region93: #{tpu_custom_call.1} parent=71 // pred_check
          %p648 = pneg %p164
        $region94: #{tpu_custom_call.1} parent=71 // pred_check_branch
          %650 = sbr.rel (%p648) target = $region96
        $region95: #{tpu_custom_call.1} parent=71 // pred_region
          %652 = dma.done [#allocation12], 2048
        $region96: #{tpu_custom_call.1} parent=71 // pred_fallthru
          _
        // Predicated region
        $region97: #{tpu_custom_call.1} parent=71 // pred_check
          %p653 = pneg %p185
        $region98: #{tpu_custom_call.1} parent=71 // pred_check_branch
          %655 = sbr.rel (%p653) target = $region100
        $region99: #{tpu_custom_call.1} parent=71 // pred_region
          %657 = dma.done [#allocation12], 2048
        $region100: #{tpu_custom_call.1} parent=71 // pred_fallthru
          _
        // Predicated region
        $region101: #{tpu_custom_call.1} parent=71 // pred_check
          %p658 = pneg %p206
        $region102: #{tpu_custom_call.1} parent=71 // pred_check_branch
          %660 = sbr.rel (%p658) target = $region104
        $region103: #{tpu_custom_call.1} parent=71 // pred_region
          %662 = dma.done [#allocation15], 2048
        $region104: #{tpu_custom_call.1} parent=71 // pred_fallthru
          _
        // Predicated region
        $region105: #{tpu_custom_call.1} parent=71 // pred_check
          %p663 = pneg %p227
        $region106: #{tpu_custom_call.1} parent=71 // pred_check_branch
          %665 = sbr.rel (%p663) target = $region108
        $region107: #{tpu_custom_call.1} parent=71 // pred_region
          %667 = dma.done [#allocation15], 256
        $region108: #{tpu_custom_call.1} parent=71 // pred_fallthru
          _
        %s668 = sand.u32 %s43, 1
        %s669 = scalar_lea.sflag [#allocation18], %s668
        %s670 = sand.u32 %s240, 1
        %s671 = smul.addr %s670, 64
        %s672 = scalar_lea.vmem [#allocation17], %s671
        // Predicated region
        $region109: #{tpu_custom_call.1} parent=71 // pred_check
          %p673 = pneg %p253
        $region110: #{tpu_custom_call.1} parent=71 // pred_check_branch
          %675 = sbr.rel (%p673) target = $region112
        $region111: #{tpu_custom_call.1} parent=71 // pred_region
          %677 = dma.done %s669, 1024
        $region112: #{tpu_custom_call.1} parent=71 // pred_fallthru
          _
        %s678 = sand.u32 %s43, 1
        %s679 = scalar_lea.sflag [#allocation18], %s678
        %s680 = sand.u32 %s266, 1
        %s681 = smul.addr %s680, 64
        %s682 = scalar_lea.vmem [#allocation19], %s681
        // Predicated region
        $region113: #{tpu_custom_call.1} parent=71 // pred_check
          %p683 = pneg %p279
        $region114: #{tpu_custom_call.1} parent=71 // pred_check_branch
          %685 = sbr.rel (%p683) target = $region116
        $region115: #{tpu_custom_call.1} parent=71 // pred_region
          %687 = dma.done %s679, 1024
        $region116: #{tpu_custom_call.1} parent=71 // pred_fallthru
          _
        %s688 = sand.u32 %s43, 1
        %s689 = scalar_lea.sflag [#allocation21], %s688
        %s690 = sand.u32 %s292, 1
        %s691 = smul.addr %s690, 64
        %s692 = scalar_lea.vmem [#allocation20], %s691
        // Predicated region
        $region117: #{tpu_custom_call.1} parent=71 // pred_check
          %p693 = pneg %p305
        $region118: #{tpu_custom_call.1} parent=71 // pred_check_branch
          %695 = sbr.rel (%p693) target = $region120
        $region119: #{tpu_custom_call.1} parent=71 // pred_region
          %697 = dma.done %s689, 1024
        $region120: #{tpu_custom_call.1} parent=71 // pred_fallthru
          _
        %s698 = sand.u32 %s43, 1
        %s699 = scalar_lea.sflag [#allocation21], %s698
        %s700 = sand.u32 %s318, 1
        %s701 = smul.addr %s700, 64
        %s702 = scalar_lea.vmem [#allocation22], %s701
        // Predicated region
        $region121: #{tpu_custom_call.1} parent=71 // pred_check
          %p703 = pneg %p331
        $region122: #{tpu_custom_call.1} parent=71 // pred_check_branch
          %705 = sbr.rel (%p703) target = $region124
        $region123: #{tpu_custom_call.1} parent=71 // pred_region
          %707 = dma.done %s699, 1024
        $region124: #{tpu_custom_call.1} parent=71 // pred_fallthru
          _
        %p708 = pneg %p59
        %p709 = pneg %p56
        %p710 = pneg %p80
        %p711 = pneg %p77
        %p712 = pneg %p101
        %p713 = pneg %p98
        %p714 = pneg %p122
        %p715 = pneg %p119
        %p716 = pneg %p143
        %p717 = pneg %p140
        %p718 = pneg %p164
        %p719 = pneg %p161
        %p720 = pneg %p185
        %p721 = pneg %p182
        %p722 = pneg %p206
        %p723 = pneg %p203
        %p724 = pneg %p227
        %p725 = pneg %p224
        %s726 = sand.u32 %s43, 1
        %s727 = scalar_lea.sflag [#allocation18], %s726
        %s728 = sand.u32 %s240, 1
        %s729 = smul.addr %s728, 64
        %s730 = scalar_lea.vmem [#allocation17], %s729
        %p731 = pneg %p253
        %p732 = pneg %p250
        %s733 = sand.u32 %s43, 1
        %s734 = scalar_lea.sflag [#allocation18], %s733
        %s735 = sand.u32 %s266, 1
        %s736 = smul.addr %s735, 64
        %s737 = scalar_lea.vmem [#allocation19], %s736
        %p738 = pneg %p279
        %p739 = pneg %p276
        %s740 = sand.u32 %s43, 1
        %s741 = scalar_lea.sflag [#allocation21], %s740
        %s742 = sand.u32 %s292, 1
        %s743 = smul.addr %s742, 64
        %s744 = scalar_lea.vmem [#allocation20], %s743
        %p745 = pneg %p305
        %p746 = pneg %p302
        %s747 = sand.u32 %s43, 1
        %s748 = scalar_lea.sflag [#allocation21], %s747
        %s749 = sand.u32 %s318, 1
        %s750 = smul.addr %s749, 64
        %s751 = scalar_lea.vmem [#allocation22], %s750
        %p752 = pneg %p331
        %p753 = pneg %p328
        %p754 = pneg %p357
        %p755 = pneg %p354
        %s756 = sand.u32 %s344, 1
        %s757 = scalar_lea.sflag [#allocation4], %s756
        %s758 = sand.u32 %s344, 1
        %s759 = smul.addr %s758, 64
        %s760 = scalar_lea.vmem [#allocation23], %s759
        %p761 = pneg %p383
        %p762 = pneg %p380
        %s763 = sand.u32 %s370, 1
        %s764 = scalar_lea.sflag [#allocation25], %s763
        %s765 = sand.u32 %s370, 1
        %s766 = smul.addr %s765, 64
        %s767 = scalar_lea.vmem [#allocation24], %s766
        %s768 = smul.u32 8, %s43
        %s769 = smul.u32 8, %s43
        %s770 = smul.u32 8, %s43
        %s771 = smul.u32 8, %s43
        %s772 = smul.u32 8, %s43
        %s773 = smul.u32 8, %s43
        %v774 = vld [vmem:[#allocation2] sm:$0xff]
        %v775 = vld [vmem:[#allocation2 + $0x8] sm:$0xff]
        %v776 = vld [vmem:[#allocation5] sm:$0xff]
        %v777 = vld [vmem:[#allocation5 + $0x8] sm:$0xff]
        %v778 = vld [vmem:[#allocation7] sm:$0xff]
        %v779 = vld [vmem:[#allocation7 + $0x8] sm:$0xff]
        %v780 = vld [vmem:[#allocation8] sm:$0xff]
        %v781 = vld [vmem:[#allocation8 + $0x8] sm:$0xff]
        %v782 = vld [vmem:[#allocation10] sm:$0xff]
        %v783 = vld [vmem:[#allocation10 + $0x8] sm:$0xff]
        %v784 = vld [vmem:[#allocation10 + $0x10] sm:$0xff]
        %v785 = vld [vmem:[#allocation10 + $0x18] sm:$0xff]
        %v786 = vld [vmem:[#allocation10 + $0x20] sm:$0xff]
        %v787 = vld [vmem:[#allocation10 + $0x28] sm:$0xff]
        %v788 = vld [vmem:[#allocation10 + $0x30] sm:$0xff]
        %v789 = vld [vmem:[#allocation10 + $0x38] sm:$0xff]
        %v790 = vld [vmem:[#allocation10 + $0x40] sm:$0xff]
        %v791 = vld [vmem:[#allocation10 + $0x48] sm:$0xff]
        %v792 = vld [vmem:[#allocation10 + $0x50] sm:$0xff]
        %v793 = vld [vmem:[#allocation10 + $0x58] sm:$0xff]
        %v794 = vld [vmem:[#allocation10 + $0x60] sm:$0xff]
        %v795 = vld [vmem:[#allocation10 + $0x68] sm:$0xff]
        %v796 = vld [vmem:[#allocation10 + $0x70] sm:$0xff]
        %v797 = vld [vmem:[#allocation10 + $0x78] sm:$0xff]
        %v798 = vld [vmem:[#allocation11] sm:$0xff]
        %v799 = vld [vmem:[#allocation11 + $0x8] sm:$0xff]
        %v800 = vld [vmem:[#allocation11 + $0x10] sm:$0xff]
        %v801 = vld [vmem:[#allocation11 + $0x18] sm:$0xff]
        %v802 = vld [vmem:[#allocation11 + $0x20] sm:$0xff]
        %v803 = vld [vmem:[#allocation11 + $0x28] sm:$0xff]
        %v804 = vld [vmem:[#allocation11 + $0x30] sm:$0xff]
        %v805 = vld [vmem:[#allocation11 + $0x38] sm:$0xff]
        %v806 = vld [vmem:[#allocation11 + $0x40] sm:$0xff]
        %v807 = vld [vmem:[#allocation11 + $0x48] sm:$0xff]
        %v808 = vld [vmem:[#allocation11 + $0x50] sm:$0xff]
        %v809 = vld [vmem:[#allocation11 + $0x58] sm:$0xff]
        %v810 = vld [vmem:[#allocation11 + $0x60] sm:$0xff]
        %v811 = vld [vmem:[#allocation11 + $0x68] sm:$0xff]
        %v812 = vld [vmem:[#allocation11 + $0x70] sm:$0xff]
        %v813 = vld [vmem:[#allocation11 + $0x78] sm:$0xff]
        %v814 = vld [vmem:[#allocation13] sm:$0xff]
        %v815 = vld [vmem:[#allocation13 + $0x8] sm:$0xff]
        %v816 = vld [vmem:[#allocation13 + $0x10] sm:$0xff]
        %v817 = vld [vmem:[#allocation13 + $0x18] sm:$0xff]
        %v818 = vld [vmem:[#allocation13 + $0x20] sm:$0xff]
        %v819 = vld [vmem:[#allocation13 + $0x28] sm:$0xff]
        %v820 = vld [vmem:[#allocation13 + $0x30] sm:$0xff]
        %v821 = vld [vmem:[#allocation13 + $0x38] sm:$0xff]
        %v822 = vld [vmem:[#allocation13 + $0x40] sm:$0xff]
        %v823 = vld [vmem:[#allocation13 + $0x48] sm:$0xff]
        %v824 = vld [vmem:[#allocation13 + $0x50] sm:$0xff]
        %v825 = vld [vmem:[#allocation13 + $0x58] sm:$0xff]
        %v826 = vld [vmem:[#allocation13 + $0x60] sm:$0xff]
        %v827 = vld [vmem:[#allocation13 + $0x68] sm:$0xff]
        %v828 = vld [vmem:[#allocation13 + $0x70] sm:$0xff]
        %v829 = vld [vmem:[#allocation13 + $0x78] sm:$0xff]
        %v830 = vld [vmem:[#allocation14] sm:$0xff]
        %v831 = vld [vmem:[#allocation14 + $0x8] sm:$0xff]
        %v832 = vld [vmem:[#allocation14 + $0x10] sm:$0xff]
        %v833 = vld [vmem:[#allocation14 + $0x18] sm:$0xff]
        %v834 = vld [vmem:[#allocation14 + $0x20] sm:$0xff]
        %v835 = vld [vmem:[#allocation14 + $0x28] sm:$0xff]
        %v836 = vld [vmem:[#allocation14 + $0x30] sm:$0xff]
        %v837 = vld [vmem:[#allocation14 + $0x38] sm:$0xff]
        %v838 = vld [vmem:[#allocation14 + $0x40] sm:$0xff]
        %v839 = vld [vmem:[#allocation14 + $0x48] sm:$0xff]
        %v840 = vld [vmem:[#allocation14 + $0x50] sm:$0xff]
        %v841 = vld [vmem:[#allocation14 + $0x58] sm:$0xff]
        %v842 = vld [vmem:[#allocation14 + $0x60] sm:$0xff]
        %v843 = vld [vmem:[#allocation14 + $0x68] sm:$0xff]
        %v844 = vld [vmem:[#allocation14 + $0x70] sm:$0xff]
        %v845 = vld [vmem:[#allocation14 + $0x78] sm:$0xff]
        %v846 = vadd.f32 %v774, %v776
        %v847 = vadd.f32 %v775, %v777
        %v848 = vadd.f32 %v778, %v780
        %v849 = vadd.f32 %v779, %v781
        %v850 = vadd.f32 %v782, %v798
        %v851 = vadd.f32 %v783, %v799
        %v852 = vadd.f32 %v784, %v800
        %v853 = vadd.f32 %v785, %v801
        %v854 = vadd.f32 %v786, %v802
        %v855 = vadd.f32 %v787, %v803
        %v856 = vadd.f32 %v788, %v804
        %v857 = vadd.f32 %v789, %v805
        %v858 = vadd.f32 %v790, %v806
        %v859 = vadd.f32 %v791, %v807
        %v860 = vadd.f32 %v792, %v808
        %v861 = vadd.f32 %v793, %v809
        %v862 = vadd.f32 %v794, %v810
        %v863 = vadd.f32 %v795, %v811
        %v864 = vadd.f32 %v796, %v812
        %v865 = vadd.f32 %v797, %v813
        %v866 = vadd.f32 %v814, %v830
        %v867 = vadd.f32 %v815, %v831
        %v868 = vadd.f32 %v816, %v832
        %v869 = vadd.f32 %v817, %v833
        %v870 = vadd.f32 %v818, %v834
        %v871 = vadd.f32 %v819, %v835
        %v872 = vadd.f32 %v820, %v836
        %v873 = vadd.f32 %v821, %v837
        %v874 = vadd.f32 %v822, %v838
        %v875 = vadd.f32 %v823, %v839
        %v876 = vadd.f32 %v824, %v840
        %v877 = vadd.f32 %v825, %v841
        %v878 = vadd.f32 %v826, %v842
        %v879 = vadd.f32 %v827, %v843
        %v880 = vadd.f32 %v828, %v844
        %v881 = vadd.f32 %v829, %v845
        %v882 = vld [vmem:[#allocation16] sm:$0xff]
        %v883 = vld [vmem:[#allocation16 + $0x8] sm:$0xff]
        %v884 = vld [vmem:[%s672] sm:$0xff]
        %v885 = vld [vmem:[%s672 + $0x8] sm:$0xff]
        %v886 = vld [vmem:[%s672 + $0x10] sm:$0xff]
        %v887 = vld [vmem:[%s672 + $0x18] sm:$0xff]
        %v888 = vld [vmem:[%s672 + $0x20] sm:$0xff]
        %v889 = vld [vmem:[%s672 + $0x28] sm:$0xff]
        %v890 = vld [vmem:[%s672 + $0x30] sm:$0xff]
        %v891 = vld [vmem:[%s672 + $0x38] sm:$0xff]
        %v892 = vld [vmem:[%s682] sm:$0xff]
        %v893 = vld [vmem:[%s682 + $0x8] sm:$0xff]
        %v894 = vld [vmem:[%s682 + $0x10] sm:$0xff]
        %v895 = vld [vmem:[%s682 + $0x18] sm:$0xff]
        %v896 = vld [vmem:[%s682 + $0x20] sm:$0xff]
        %v897 = vld [vmem:[%s682 + $0x28] sm:$0xff]
        %v898 = vld [vmem:[%s682 + $0x30] sm:$0xff]
        %v899 = vld [vmem:[%s682 + $0x38] sm:$0xff]
        %v900 = vld [vmem:[%s692] sm:$0xff]
        %v901 = vld [vmem:[%s692 + $0x8] sm:$0xff]
        %v902 = vld [vmem:[%s692 + $0x10] sm:$0xff]
        %v903 = vld [vmem:[%s692 + $0x18] sm:$0xff]
        %v904 = vld [vmem:[%s692 + $0x20] sm:$0xff]
        %v905 = vld [vmem:[%s692 + $0x28] sm:$0xff]
        %v906 = vld [vmem:[%s692 + $0x30] sm:$0xff]
        %v907 = vld [vmem:[%s692 + $0x38] sm:$0xff]
        %v908 = vld [vmem:[%s702] sm:$0xff]
        %v909 = vld [vmem:[%s702 + $0x8] sm:$0xff]
        %v910 = vld [vmem:[%s702 + $0x10] sm:$0xff]
        %v911 = vld [vmem:[%s702 + $0x18] sm:$0xff]
        %v912 = vld [vmem:[%s702 + $0x20] sm:$0xff]
        %v913 = vld [vmem:[%s702 + $0x28] sm:$0xff]
        %v914 = vld [vmem:[%s702 + $0x30] sm:$0xff]
        %v915 = vld [vmem:[%s702 + $0x38] sm:$0xff]
        %v916 = vadd.f32 %v884, %v892
        %v917 = vadd.f32 %v885, %v893
        %v918 = vadd.f32 %v886, %v894
        %v919 = vadd.f32 %v887, %v895
        %v920 = vadd.f32 %v888, %v896
        %v921 = vadd.f32 %v889, %v897
        %v922 = vadd.f32 %v890, %v898
        %v923 = vadd.f32 %v891, %v899
        %924 = vmatpush.msra.mxu0 %v797
        %925 = vmatpush.msra.mxu0 %v796
        %926 = vmatpush.msra.mxu0 %v795
        %927 = vmatpush.msra.mxu0 %v794
        %928 = vmatpush.msra.mxu0 %v793
        %929 = vmatpush.msra.mxu0 %v792
        %930 = vmatpush.msra.mxu0 %v791
        %931 = vmatpush.msra.mxu0 %v790
        %932 = vmatpush.msra.mxu0 %v789
        %933 = vmatpush.msra.mxu0 %v788
        %934 = vmatpush.msra.mxu0 %v787
        %935 = vmatpush.msra.mxu0 %v786
        %936 = vmatpush.msra.mxu0 %v785
        %937 = vmatpush.msra.mxu0 %v784
        %938 = vmatpush.msra.mxu0 %v783
        %939 = vmatpush.msra.mxu0 %v782
        %940 = vmatmul.f32.gmra.mxu0 %v884
        %v941 = vpop.f32.mrf.mxu0
        %v942 = vadd.f32 0.0, %v941
        %943 = vmatmul.f32.gmra.mxu0 %v885
        %v944 = vpop.f32.mrf.mxu0
        %v945 = vadd.f32 0.0, %v944
        %946 = vmatmul.f32.gmra.mxu0 %v886
        %v947 = vpop.f32.mrf.mxu0
        %v948 = vadd.f32 0.0, %v947
        %949 = vmatmul.f32.gmra.mxu0 %v887
        %v950 = vpop.f32.mrf.mxu0
        %v951 = vadd.f32 0.0, %v950
        %952 = vmatmul.f32.gmra.mxu0 %v888
        %v953 = vpop.f32.mrf.mxu0
        %v954 = vadd.f32 0.0, %v953
        %955 = vmatmul.f32.gmra.mxu0 %v889
        %v956 = vpop.f32.mrf.mxu0
        %v957 = vadd.f32 0.0, %v956
        %958 = vmatmul.f32.gmra.mxu0 %v890
        %v959 = vpop.f32.mrf.mxu0
        %v960 = vadd.f32 0.0, %v959
        %961 = vmatmul.f32.gmra.mxu0 %v891
        %v962 = vpop.f32.mrf.mxu0
        %v963 = vadd.f32 0.0, %v962
        %964 = vdwg.mxu0
        %965 = vmatpush.msra.mxu0 %v813
        %966 = vmatpush.msra.mxu0 %v812
        %967 = vmatpush.msra.mxu0 %v811
        %968 = vmatpush.msra.mxu0 %v810
        %969 = vmatpush.msra.mxu0 %v809
        %970 = vmatpush.msra.mxu0 %v808
        %971 = vmatpush.msra.mxu0 %v807
        %972 = vmatpush.msra.mxu0 %v806
        %973 = vmatpush.msra.mxu0 %v805
        %974 = vmatpush.msra.mxu0 %v804
        %975 = vmatpush.msra.mxu0 %v803
        %976 = vmatpush.msra.mxu0 %v802
        %977 = vmatpush.msra.mxu0 %v801
        %978 = vmatpush.msra.mxu0 %v800
        %979 = vmatpush.msra.mxu0 %v799
        %980 = vmatpush.msra.mxu0 %v798
        %981 = vmatmul.f32.gmra.mxu0 %v892
        %v982 = vpop.f32.mrf.mxu0
        %v983 = vadd.f32 0.0, %v982
        %984 = vmatmul.f32.gmra.mxu0 %v893
        %v985 = vpop.f32.mrf.mxu0
        %v986 = vadd.f32 0.0, %v985
        %987 = vmatmul.f32.gmra.mxu0 %v894
        %v988 = vpop.f32.mrf.mxu0
        %v989 = vadd.f32 0.0, %v988
        %990 = vmatmul.f32.gmra.mxu0 %v895
        %v991 = vpop.f32.mrf.mxu0
        %v992 = vadd.f32 0.0, %v991
        %993 = vmatmul.f32.gmra.mxu0 %v896
        %v994 = vpop.f32.mrf.mxu0
        %v995 = vadd.f32 0.0, %v994
        %996 = vmatmul.f32.gmra.mxu0 %v897
        %v997 = vpop.f32.mrf.mxu0
        %v998 = vadd.f32 0.0, %v997
        %999 = vmatmul.f32.gmra.mxu0 %v898
        %v1000 = vpop.f32.mrf.mxu0
        %v1001 = vadd.f32 0.0, %v1000
        %1002 = vmatmul.f32.gmra.mxu0 %v899
        %v1003 = vpop.f32.mrf.mxu0
        %v1004 = vadd.f32 0.0, %v1003
        %1005 = vdwg.mxu0
        %1006 = vmatpush.msra.mxu0 %v865
        %1007 = vmatpush.msra.mxu0 %v864
        %1008 = vmatpush.msra.mxu0 %v863
        %1009 = vmatpush.msra.mxu0 %v862
        %1010 = vmatpush.msra.mxu0 %v861
        %1011 = vmatpush.msra.mxu0 %v860
        %1012 = vmatpush.msra.mxu0 %v859
        %1013 = vmatpush.msra.mxu0 %v858
        %1014 = vmatpush.msra.mxu0 %v857
        %1015 = vmatpush.msra.mxu0 %v856
        %1016 = vmatpush.msra.mxu0 %v855
        %1017 = vmatpush.msra.mxu0 %v854
        %1018 = vmatpush.msra.mxu0 %v853
        %1019 = vmatpush.msra.mxu0 %v852
        %1020 = vmatpush.msra.mxu0 %v851
        %1021 = vmatpush.msra.mxu0 %v850
        %1022 = vmatmul.f32.gmra.mxu0 %v916
        %v1023 = vpop.f32.mrf.mxu0
        %v1024 = vadd.f32 0.0, %v1023
        %1025 = vmatmul.f32.gmra.mxu0 %v917
        %v1026 = vpop.f32.mrf.mxu0
        %v1027 = vadd.f32 0.0, %v1026
        %1028 = vmatmul.f32.gmra.mxu0 %v918
        %v1029 = vpop.f32.mrf.mxu0
        %v1030 = vadd.f32 0.0, %v1029
        %1031 = vmatmul.f32.gmra.mxu0 %v919
        %v1032 = vpop.f32.mrf.mxu0
        %v1033 = vadd.f32 0.0, %v1032
        %1034 = vmatmul.f32.gmra.mxu0 %v920
        %v1035 = vpop.f32.mrf.mxu0
        %v1036 = vadd.f32 0.0, %v1035
        %1037 = vmatmul.f32.gmra.mxu0 %v921
        %v1038 = vpop.f32.mrf.mxu0
        %v1039 = vadd.f32 0.0, %v1038
        %1040 = vmatmul.f32.gmra.mxu0 %v922
        %v1041 = vpop.f32.mrf.mxu0
        %v1042 = vadd.f32 0.0, %v1041
        %1043 = vmatmul.f32.gmra.mxu0 %v923
        %v1044 = vpop.f32.mrf.mxu0
        %v1045 = vadd.f32 0.0, %v1044
        %1046 = vdwg.mxu0
        %v1047 = vsub.f32 %v942, %v983
        %v1048 = vsub.f32 %v945, %v986
        %v1049 = vsub.f32 %v948, %v989
        %v1050 = vsub.f32 %v951, %v992
        %v1051 = vsub.f32 %v954, %v995
        %v1052 = vsub.f32 %v957, %v998
        %v1053 = vsub.f32 %v960, %v1001
        %v1054 = vsub.f32 %v963, %v1004
        %v1055 = vsub.f32 %v1024, %v942
        %v1056 = vsub.f32 %v1027, %v945
        %v1057 = vsub.f32 %v1030, %v948
        %v1058 = vsub.f32 %v1033, %v951
        %v1059 = vsub.f32 %v1036, %v954
        %v1060 = vsub.f32 %v1039, %v957
        %v1061 = vsub.f32 %v1042, %v960
        %v1062 = vsub.f32 %v1045, %v963
        %v1063 = vsub.f32 %v1055, %v983
        %v1064 = vsub.f32 %v1056, %v986
        %v1065 = vsub.f32 %v1057, %v989
        %v1066 = vsub.f32 %v1058, %v992
        %v1067 = vsub.f32 %v1059, %v995
        %v1068 = vsub.f32 %v1060, %v998
        %v1069 = vsub.f32 %v1061, %v1001
        %v1070 = vsub.f32 %v1062, %v1004
        %v1071 = vadd.f32 %v1047, %v1063
        %v1072 = vadd.f32 %v1048, %v1064
        %vm1073 = vcmask 130048
        %v1075 = vsel %vm1073, %v774, 0
        %v1078 = vsel %vm1073, %v775, 0
        %1080 = vmatpush.msra.mxu0 0.0
        %1081 = vmatpush.msra.mxu0 0.0
        %1082 = vmatpush.msra.mxu0 0.0
        %1083 = vmatpush.msra.mxu0 0.0
        %1084 = vmatpush.msra.mxu0 0.0
        %1085 = vmatpush.msra.mxu0 0.0
        %1086 = vmatpush.msra.mxu0 0.0
        %1087 = vmatpush.msra.mxu0 0.0
        %1088 = vmatpush.msra.mxu0 0.0
        %1089 = vmatpush.msra.mxu0 0.0
        %1090 = vmatpush.msra.mxu0 0.0
        %1091 = vmatpush.msra.mxu0 0.0
        %1092 = vmatpush.msra.mxu0 0.0
        %1093 = vmatpush.msra.mxu0 0.0
        %1094 = vmatpush.msra.mxu0 %v1048
        %1095 = vmatpush.msra.mxu0 %v1047
        %1096 = vmatmul.f32.gmra.mxu0 %v1075
        %v1097 = vpop.f32.mrf.mxu0
        %v1098 = vadd.f32 0.0, %v1097
        %1099 = vmatmul.f32.gmra.mxu0 %v1078
        %v1100 = vpop.f32.mrf.mxu0
        %v1101 = vadd.f32 0.0, %v1100
        %1102 = vdwg.mxu0
        %v1104 = vsel %vm1073, %v776, 0
        %v1107 = vsel %vm1073, %v777, 0
        %1109 = vmatpush.msra.mxu0 0.0
        %1110 = vmatpush.msra.mxu0 0.0
        %1111 = vmatpush.msra.mxu0 0.0
        %1112 = vmatpush.msra.mxu0 0.0
        %1113 = vmatpush.msra.mxu0 0.0
        %1114 = vmatpush.msra.mxu0 0.0
        %1115 = vmatpush.msra.mxu0 0.0
        %1116 = vmatpush.msra.mxu0 0.0
        %1117 = vmatpush.msra.mxu0 0.0
        %1118 = vmatpush.msra.mxu0 0.0
        %1119 = vmatpush.msra.mxu0 0.0
        %1120 = vmatpush.msra.mxu0 0.0
        %1121 = vmatpush.msra.mxu0 0.0
        %1122 = vmatpush.msra.mxu0 0.0
        %1123 = vmatpush.msra.mxu0 %v1064
        %1124 = vmatpush.msra.mxu0 %v1063
        %1125 = vmatmul.f32.gmra.mxu0 %v1104
        %v1126 = vpop.f32.mrf.mxu0
        %v1127 = vadd.f32 0.0, %v1126
        %1128 = vmatmul.f32.gmra.mxu0 %v1107
        %v1129 = vpop.f32.mrf.mxu0
        %v1130 = vadd.f32 0.0, %v1129
        %1131 = vdwg.mxu0
        %v1133 = vsel %vm1073, %v846, 0
        %v1136 = vsel %vm1073, %v847, 0
        %1138 = vmatpush.msra.mxu0 0.0
        %1139 = vmatpush.msra.mxu0 0.0
        %1140 = vmatpush.msra.mxu0 0.0
        %1141 = vmatpush.msra.mxu0 0.0
        %1142 = vmatpush.msra.mxu0 0.0
        %1143 = vmatpush.msra.mxu0 0.0
        %1144 = vmatpush.msra.mxu0 0.0
        %1145 = vmatpush.msra.mxu0 0.0
        %1146 = vmatpush.msra.mxu0 0.0
        %1147 = vmatpush.msra.mxu0 0.0
        %1148 = vmatpush.msra.mxu0 0.0
        %1149 = vmatpush.msra.mxu0 0.0
        %1150 = vmatpush.msra.mxu0 0.0
        %1151 = vmatpush.msra.mxu0 0.0
        %1152 = vmatpush.msra.mxu0 %v1072
        %1153 = vmatpush.msra.mxu0 %v1071
        %1154 = vmatmul.f32.gmra.mxu0 %v1133
        %v1155 = vpop.f32.mrf.mxu0
        %v1156 = vadd.f32 0.0, %v1155
        %1157 = vmatmul.f32.gmra.mxu0 %v1136
        %v1158 = vpop.f32.mrf.mxu0
        %v1159 = vadd.f32 0.0, %v1158
        %1160 = vdwg.mxu0
        %v1161 = vsub.f32 %v1098, %v1127
        %v1162 = vsub.f32 %v1101, %v1130
        %v1163 = vsub.f32 %v1156, %v1098
        %v1164 = vsub.f32 %v1159, %v1101
        %v1165 = vsub.f32 %v1163, %v1127
        %v1166 = vsub.f32 %v1164, %v1130
        %v1167 = vsub.f32 %v900, %v1161
        %v1168 = vsub.f32 %v901, %v1162
        %v1169 = vmul.f32 %v882, %v1167
        %v1170 = vmul.f32 %v883, %v1168
        %v1171 = vadd.f32 %v1161, %v1169
        %v1172 = vadd.f32 %v1162, %v1170
        %v1173 = vsub.f32 %v908, %v1165
        %v1174 = vsub.f32 %v909, %v1166
        %v1175 = vmul.f32 %v882, %v1173
        %v1176 = vmul.f32 %v883, %v1174
        %v1177 = vadd.f32 %v1165, %v1175
        %v1178 = vadd.f32 %v1166, %v1176
        %v1179 = vadd.f32 %v1171, %v1177
        %v1180 = vadd.f32 %v1172, %v1178
        %v1182 = vsel %vm1073, %v778, 0
        %v1185 = vsel %vm1073, %v779, 0
        %1187 = vmatpush.msra.mxu0 0.0
        %1188 = vmatpush.msra.mxu0 0.0
        %1189 = vmatpush.msra.mxu0 0.0
        %1190 = vmatpush.msra.mxu0 0.0
        %1191 = vmatpush.msra.mxu0 0.0
        %1192 = vmatpush.msra.mxu0 0.0
        %1193 = vmatpush.msra.mxu0 0.0
        %1194 = vmatpush.msra.mxu0 0.0
        %1195 = vmatpush.msra.mxu0 0.0
        %1196 = vmatpush.msra.mxu0 0.0
        %1197 = vmatpush.msra.mxu0 0.0
        %1198 = vmatpush.msra.mxu0 0.0
        %1199 = vmatpush.msra.mxu0 0.0
        %1200 = vmatpush.msra.mxu0 0.0
        %1201 = vmatpush.msra.mxu0 %v1172
        %1202 = vmatpush.msra.mxu0 %v1171
        %1203 = vmatmul.f32.gmra.mxu0 %v1182
        %v1204 = vpop.f32.mrf.mxu0
        %v1205 = vadd.f32 0.0, %v1204
        %1206 = vmatmul.f32.gmra.mxu0 %v1185
        %v1207 = vpop.f32.mrf.mxu0
        %v1208 = vadd.f32 0.0, %v1207
        %1209 = vdwg.mxu0
        %v1211 = vsel %vm1073, %v780, 0
        %v1214 = vsel %vm1073, %v781, 0
        %1216 = vmatpush.msra.mxu0 0.0
        %1217 = vmatpush.msra.mxu0 0.0
        %1218 = vmatpush.msra.mxu0 0.0
        %1219 = vmatpush.msra.mxu0 0.0
        %1220 = vmatpush.msra.mxu0 0.0
        %1221 = vmatpush.msra.mxu0 0.0
        %1222 = vmatpush.msra.mxu0 0.0
        %1223 = vmatpush.msra.mxu0 0.0
        %1224 = vmatpush.msra.mxu0 0.0
        %1225 = vmatpush.msra.mxu0 0.0
        %1226 = vmatpush.msra.mxu0 0.0
        %1227 = vmatpush.msra.mxu0 0.0
        %1228 = vmatpush.msra.mxu0 0.0
        %1229 = vmatpush.msra.mxu0 0.0
        %1230 = vmatpush.msra.mxu0 %v1178
        %1231 = vmatpush.msra.mxu0 %v1177
        %1232 = vmatmul.f32.gmra.mxu0 %v1211
        %v1233 = vpop.f32.mrf.mxu0
        %v1234 = vadd.f32 0.0, %v1233
        %1235 = vmatmul.f32.gmra.mxu0 %v1214
        %v1236 = vpop.f32.mrf.mxu0
        %v1237 = vadd.f32 0.0, %v1236
        %1238 = vdwg.mxu0
        %v1240 = vsel %vm1073, %v848, 0
        %v1243 = vsel %vm1073, %v849, 0
        %1245 = vmatpush.msra.mxu0 0.0
        %1246 = vmatpush.msra.mxu0 0.0
        %1247 = vmatpush.msra.mxu0 0.0
        %1248 = vmatpush.msra.mxu0 0.0
        %1249 = vmatpush.msra.mxu0 0.0
        %1250 = vmatpush.msra.mxu0 0.0
        %1251 = vmatpush.msra.mxu0 0.0
        %1252 = vmatpush.msra.mxu0 0.0
        %1253 = vmatpush.msra.mxu0 0.0
        %1254 = vmatpush.msra.mxu0 0.0
        %1255 = vmatpush.msra.mxu0 0.0
        %1256 = vmatpush.msra.mxu0 0.0
        %1257 = vmatpush.msra.mxu0 0.0
        %1258 = vmatpush.msra.mxu0 0.0
        %1259 = vmatpush.msra.mxu0 %v1180
        %1260 = vmatpush.msra.mxu0 %v1179
        %1261 = vmatmul.f32.gmra.mxu0 %v1240
        %v1262 = vpop.f32.mrf.mxu0
        %v1263 = vadd.f32 0.0, %v1262
        %1264 = vmatmul.f32.gmra.mxu0 %v1243
        %v1265 = vpop.f32.mrf.mxu0
        %v1266 = vadd.f32 0.0, %v1265
        %1267 = vdwg.mxu0
        %v1268 = vsub.f32 %v1205, %v1234
        %v1269 = vsub.f32 %v1208, %v1237
        %v1270 = vsub.f32 %v1263, %v1205
        %v1271 = vsub.f32 %v1266, %v1208
        %v1272 = vsub.f32 %v1270, %v1234
        %v1273 = vsub.f32 %v1271, %v1237
        %v1274 = vadd.f32 %v1049, %v1065
        %v1275 = vadd.f32 %v1050, %v1066
        %1276 = vmatpush.msra.mxu0 0.0
        %1277 = vmatpush.msra.mxu0 0.0
        %1278 = vmatpush.msra.mxu0 0.0
        %1279 = vmatpush.msra.mxu0 0.0
        %1280 = vmatpush.msra.mxu0 0.0
        %1281 = vmatpush.msra.mxu0 0.0
        %1282 = vmatpush.msra.mxu0 0.0
        %1283 = vmatpush.msra.mxu0 0.0
        %1284 = vmatpush.msra.mxu0 0.0
        %1285 = vmatpush.msra.mxu0 0.0
        %1286 = vmatpush.msra.mxu0 0.0
        %1287 = vmatpush.msra.mxu0 0.0
        %1288 = vmatpush.msra.mxu0 0.0
        %1289 = vmatpush.msra.mxu0 0.0
        %1290 = vmatpush.msra.mxu0 %v1050
        %1291 = vmatpush.msra.mxu0 %v1049
        %1292 = vmatmul.f32.gmra.mxu0 %v1075
        %v1293 = vpop.f32.mrf.mxu0
        %v1294 = vadd.f32 0.0, %v1293
        %1295 = vmatmul.f32.gmra.mxu0 %v1078
        %v1296 = vpop.f32.mrf.mxu0
        %v1297 = vadd.f32 0.0, %v1296
        %1298 = vdwg.mxu0
        %1299 = vmatpush.msra.mxu0 0.0
        %1300 = vmatpush.msra.mxu0 0.0
        %1301 = vmatpush.msra.mxu0 0.0
        %1302 = vmatpush.msra.mxu0 0.0
        %1303 = vmatpush.msra.mxu0 0.0
        %1304 = vmatpush.msra.mxu0 0.0
        %1305 = vmatpush.msra.mxu0 0.0
        %1306 = vmatpush.msra.mxu0 0.0
        %1307 = vmatpush.msra.mxu0 0.0
        %1308 = vmatpush.msra.mxu0 0.0
        %1309 = vmatpush.msra.mxu0 0.0
        %1310 = vmatpush.msra.mxu0 0.0
        %1311 = vmatpush.msra.mxu0 0.0
        %1312 = vmatpush.msra.mxu0 0.0
        %1313 = vmatpush.msra.mxu0 %v1066
        %1314 = vmatpush.msra.mxu0 %v1065
        %1315 = vmatmul.f32.gmra.mxu0 %v1104
        %v1316 = vpop.f32.mrf.mxu0
        %v1317 = vadd.f32 0.0, %v1316
        %1318 = vmatmul.f32.gmra.mxu0 %v1107
        %v1319 = vpop.f32.mrf.mxu0
        %v1320 = vadd.f32 0.0, %v1319
        %1321 = vdwg.mxu0
        %1322 = vmatpush.msra.mxu0 0.0
        %1323 = vmatpush.msra.mxu0 0.0
        %1324 = vmatpush.msra.mxu0 0.0
        %1325 = vmatpush.msra.mxu0 0.0
        %1326 = vmatpush.msra.mxu0 0.0
        %1327 = vmatpush.msra.mxu0 0.0
        %1328 = vmatpush.msra.mxu0 0.0
        %1329 = vmatpush.msra.mxu0 0.0
        %1330 = vmatpush.msra.mxu0 0.0
        %1331 = vmatpush.msra.mxu0 0.0
        %1332 = vmatpush.msra.mxu0 0.0
        %1333 = vmatpush.msra.mxu0 0.0
        %1334 = vmatpush.msra.mxu0 0.0
        %1335 = vmatpush.msra.mxu0 0.0
        %1336 = vmatpush.msra.mxu0 %v1275
        %1337 = vmatpush.msra.mxu0 %v1274
        %1338 = vmatmul.f32.gmra.mxu0 %v1133
        %v1339 = vpop.f32.mrf.mxu0
        %v1340 = vadd.f32 0.0, %v1339
        %1341 = vmatmul.f32.gmra.mxu0 %v1136
        %v1342 = vpop.f32.mrf.mxu0
        %v1343 = vadd.f32 0.0, %v1342
        %1344 = vdwg.mxu0
        %v1345 = vsub.f32 %v1294, %v1317
        %v1346 = vsub.f32 %v1297, %v1320
        %v1347 = vsub.f32 %v1340, %v1294
        %v1348 = vsub.f32 %v1343, %v1297
        %v1349 = vsub.f32 %v1347, %v1317
        %v1350 = vsub.f32 %v1348, %v1320
        %v1351 = vsub.f32 %v902, %v1345
        %v1352 = vsub.f32 %v903, %v1346
        %v1353 = vmul.f32 %v882, %v1351
        %v1354 = vmul.f32 %v883, %v1352
        %v1355 = vadd.f32 %v1345, %v1353
        %v1356 = vadd.f32 %v1346, %v1354
        %v1357 = vsub.f32 %v910, %v1349
        %v1358 = vsub.f32 %v911, %v1350
        %v1359 = vmul.f32 %v882, %v1357
        %v1360 = vmul.f32 %v883, %v1358
        %v1361 = vadd.f32 %v1349, %v1359
        %v1362 = vadd.f32 %v1350, %v1360
        %v1363 = vadd.f32 %v1355, %v1361
        %v1364 = vadd.f32 %v1356, %v1362
        %1365 = vmatpush.msra.mxu0 0.0
        %1366 = vmatpush.msra.mxu0 0.0
        %1367 = vmatpush.msra.mxu0 0.0
        %1368 = vmatpush.msra.mxu0 0.0
        %1369 = vmatpush.msra.mxu0 0.0
        %1370 = vmatpush.msra.mxu0 0.0
        %1371 = vmatpush.msra.mxu0 0.0
        %1372 = vmatpush.msra.mxu0 0.0
        %1373 = vmatpush.msra.mxu0 0.0
        %1374 = vmatpush.msra.mxu0 0.0
        %1375 = vmatpush.msra.mxu0 0.0
        %1376 = vmatpush.msra.mxu0 0.0
        %1377 = vmatpush.msra.mxu0 0.0
        %1378 = vmatpush.msra.mxu0 0.0
        %1379 = vmatpush.msra.mxu0 %v1356
        %1380 = vmatpush.msra.mxu0 %v1355
        %1381 = vmatmul.f32.gmra.mxu0 %v1182
        %v1382 = vpop.f32.mrf.mxu0
        %v1383 = vadd.f32 0.0, %v1382
        %1384 = vmatmul.f32.gmra.mxu0 %v1185
        %v1385 = vpop.f32.mrf.mxu0
        %v1386 = vadd.f32 0.0, %v1385
        %1387 = vdwg.mxu0
        %1388 = vmatpush.msra.mxu0 0.0
        %1389 = vmatpush.msra.mxu0 0.0
        %1390 = vmatpush.msra.mxu0 0.0
        %1391 = vmatpush.msra.mxu0 0.0
        %1392 = vmatpush.msra.mxu0 0.0
        %1393 = vmatpush.msra.mxu0 0.0
        %1394 = vmatpush.msra.mxu0 0.0
        %1395 = vmatpush.msra.mxu0 0.0
        %1396 = vmatpush.msra.mxu0 0.0
        %1397 = vmatpush.msra.mxu0 0.0
        %1398 = vmatpush.msra.mxu0 0.0
        %1399 = vmatpush.msra.mxu0 0.0
        %1400 = vmatpush.msra.mxu0 0.0
        %1401 = vmatpush.msra.mxu0 0.0
        %1402 = vmatpush.msra.mxu0 %v1362
        %1403 = vmatpush.msra.mxu0 %v1361
        %1404 = vmatmul.f32.gmra.mxu0 %v1211
        %v1405 = vpop.f32.mrf.mxu0
        %v1406 = vadd.f32 0.0, %v1405
        %1407 = vmatmul.f32.gmra.mxu0 %v1214
        %v1408 = vpop.f32.mrf.mxu0
        %v1409 = vadd.f32 0.0, %v1408
        %1410 = vdwg.mxu0
        %1411 = vmatpush.msra.mxu0 0.0
        %1412 = vmatpush.msra.mxu0 0.0
        %1413 = vmatpush.msra.mxu0 0.0
        %1414 = vmatpush.msra.mxu0 0.0
        %1415 = vmatpush.msra.mxu0 0.0
        %1416 = vmatpush.msra.mxu0 0.0
        %1417 = vmatpush.msra.mxu0 0.0
        %1418 = vmatpush.msra.mxu0 0.0
        %1419 = vmatpush.msra.mxu0 0.0
        %1420 = vmatpush.msra.mxu0 0.0
        %1421 = vmatpush.msra.mxu0 0.0
        %1422 = vmatpush.msra.mxu0 0.0
        %1423 = vmatpush.msra.mxu0 0.0
        %1424 = vmatpush.msra.mxu0 0.0
        %1425 = vmatpush.msra.mxu0 %v1364
        %1426 = vmatpush.msra.mxu0 %v1363
        %1427 = vmatmul.f32.gmra.mxu0 %v1240
        %v1428 = vpop.f32.mrf.mxu0
        %v1429 = vadd.f32 0.0, %v1428
        %1430 = vmatmul.f32.gmra.mxu0 %v1243
        %v1431 = vpop.f32.mrf.mxu0
        %v1432 = vadd.f32 0.0, %v1431
        %1433 = vdwg.mxu0
        %v1434 = vsub.f32 %v1383, %v1406
        %v1435 = vsub.f32 %v1386, %v1409
        %v1436 = vsub.f32 %v1429, %v1383
        %v1437 = vsub.f32 %v1432, %v1386
        %v1438 = vsub.f32 %v1436, %v1406
        %v1439 = vsub.f32 %v1437, %v1409
        %v1440 = vadd.f32 %v1051, %v1067
        %v1441 = vadd.f32 %v1052, %v1068
        %1442 = vmatpush.msra.mxu0 0.0
        %1443 = vmatpush.msra.mxu0 0.0
        %1444 = vmatpush.msra.mxu0 0.0
        %1445 = vmatpush.msra.mxu0 0.0
        %1446 = vmatpush.msra.mxu0 0.0
        %1447 = vmatpush.msra.mxu0 0.0
        %1448 = vmatpush.msra.mxu0 0.0
        %1449 = vmatpush.msra.mxu0 0.0
        %1450 = vmatpush.msra.mxu0 0.0
        %1451 = vmatpush.msra.mxu0 0.0
        %1452 = vmatpush.msra.mxu0 0.0
        %1453 = vmatpush.msra.mxu0 0.0
        %1454 = vmatpush.msra.mxu0 0.0
        %1455 = vmatpush.msra.mxu0 0.0
        %1456 = vmatpush.msra.mxu0 %v1052
        %1457 = vmatpush.msra.mxu0 %v1051
        %1458 = vmatmul.f32.gmra.mxu0 %v1075
        %v1459 = vpop.f32.mrf.mxu0
        %v1460 = vadd.f32 0.0, %v1459
        %1461 = vmatmul.f32.gmra.mxu0 %v1078
        %v1462 = vpop.f32.mrf.mxu0
        %v1463 = vadd.f32 0.0, %v1462
        %1464 = vdwg.mxu0
        %1465 = vmatpush.msra.mxu0 0.0
        %1466 = vmatpush.msra.mxu0 0.0
        %1467 = vmatpush.msra.mxu0 0.0
        %1468 = vmatpush.msra.mxu0 0.0
        %1469 = vmatpush.msra.mxu0 0.0
        %1470 = vmatpush.msra.mxu0 0.0
        %1471 = vmatpush.msra.mxu0 0.0
        %1472 = vmatpush.msra.mxu0 0.0
        %1473 = vmatpush.msra.mxu0 0.0
        %1474 = vmatpush.msra.mxu0 0.0
        %1475 = vmatpush.msra.mxu0 0.0
        %1476 = vmatpush.msra.mxu0 0.0
        %1477 = vmatpush.msra.mxu0 0.0
        %1478 = vmatpush.msra.mxu0 0.0
        %1479 = vmatpush.msra.mxu0 %v1068
        %1480 = vmatpush.msra.mxu0 %v1067
        %1481 = vmatmul.f32.gmra.mxu0 %v1104
        %v1482 = vpop.f32.mrf.mxu0
        %v1483 = vadd.f32 0.0, %v1482
        %1484 = vmatmul.f32.gmra.mxu0 %v1107
        %v1485 = vpop.f32.mrf.mxu0
        %v1486 = vadd.f32 0.0, %v1485
        %1487 = vdwg.mxu0
        %1488 = vmatpush.msra.mxu0 0.0
        %1489 = vmatpush.msra.mxu0 0.0
        %1490 = vmatpush.msra.mxu0 0.0
        %1491 = vmatpush.msra.mxu0 0.0
        %1492 = vmatpush.msra.mxu0 0.0
        %1493 = vmatpush.msra.mxu0 0.0
        %1494 = vmatpush.msra.mxu0 0.0
        %1495 = vmatpush.msra.mxu0 0.0
        %1496 = vmatpush.msra.mxu0 0.0
        %1497 = vmatpush.msra.mxu0 0.0
        %1498 = vmatpush.msra.mxu0 0.0
        %1499 = vmatpush.msra.mxu0 0.0
        %1500 = vmatpush.msra.mxu0 0.0
        %1501 = vmatpush.msra.mxu0 0.0
        %1502 = vmatpush.msra.mxu0 %v1441
        %1503 = vmatpush.msra.mxu0 %v1440
        %1504 = vmatmul.f32.gmra.mxu0 %v1133
        %v1505 = vpop.f32.mrf.mxu0
        %v1506 = vadd.f32 0.0, %v1505
        %1507 = vmatmul.f32.gmra.mxu0 %v1136
        %v1508 = vpop.f32.mrf.mxu0
        %v1509 = vadd.f32 0.0, %v1508
        %1510 = vdwg.mxu0
        %v1511 = vsub.f32 %v1460, %v1483
        %v1512 = vsub.f32 %v1463, %v1486
        %v1513 = vsub.f32 %v1506, %v1460
        %v1514 = vsub.f32 %v1509, %v1463
        %v1515 = vsub.f32 %v1513, %v1483
        %v1516 = vsub.f32 %v1514, %v1486
        %v1517 = vsub.f32 %v904, %v1511
        %v1518 = vsub.f32 %v905, %v1512
        %v1519 = vmul.f32 %v882, %v1517
        %v1520 = vmul.f32 %v883, %v1518
        %v1521 = vadd.f32 %v1511, %v1519
        %v1522 = vadd.f32 %v1512, %v1520
        %v1523 = vsub.f32 %v912, %v1515
        %v1524 = vsub.f32 %v913, %v1516
        %v1525 = vmul.f32 %v882, %v1523
        %v1526 = vmul.f32 %v883, %v1524
        %v1527 = vadd.f32 %v1515, %v1525
        %v1528 = vadd.f32 %v1516, %v1526
        %v1529 = vadd.f32 %v1521, %v1527
        %v1530 = vadd.f32 %v1522, %v1528
        %1531 = vmatpush.msra.mxu0 0.0
        %1532 = vmatpush.msra.mxu0 0.0
        %1533 = vmatpush.msra.mxu0 0.0
        %1534 = vmatpush.msra.mxu0 0.0
        %1535 = vmatpush.msra.mxu0 0.0
        %1536 = vmatpush.msra.mxu0 0.0
        %1537 = vmatpush.msra.mxu0 0.0
        %1538 = vmatpush.msra.mxu0 0.0
        %1539 = vmatpush.msra.mxu0 0.0
        %1540 = vmatpush.msra.mxu0 0.0
        %1541 = vmatpush.msra.mxu0 0.0
        %1542 = vmatpush.msra.mxu0 0.0
        %1543 = vmatpush.msra.mxu0 0.0
        %1544 = vmatpush.msra.mxu0 0.0
        %1545 = vmatpush.msra.mxu0 %v1522
        %1546 = vmatpush.msra.mxu0 %v1521
        %1547 = vmatmul.f32.gmra.mxu0 %v1182
        %v1548 = vpop.f32.mrf.mxu0
        %v1549 = vadd.f32 0.0, %v1548
        %1550 = vmatmul.f32.gmra.mxu0 %v1185
        %v1551 = vpop.f32.mrf.mxu0
        %v1552 = vadd.f32 0.0, %v1551
        %1553 = vdwg.mxu0
        %1554 = vmatpush.msra.mxu0 0.0
        %1555 = vmatpush.msra.mxu0 0.0
        %1556 = vmatpush.msra.mxu0 0.0
        %1557 = vmatpush.msra.mxu0 0.0
        %1558 = vmatpush.msra.mxu0 0.0
        %1559 = vmatpush.msra.mxu0 0.0
        %1560 = vmatpush.msra.mxu0 0.0
        %1561 = vmatpush.msra.mxu0 0.0
        %1562 = vmatpush.msra.mxu0 0.0
        %1563 = vmatpush.msra.mxu0 0.0
        %1564 = vmatpush.msra.mxu0 0.0
        %1565 = vmatpush.msra.mxu0 0.0
        %1566 = vmatpush.msra.mxu0 0.0
        %1567 = vmatpush.msra.mxu0 0.0
        %1568 = vmatpush.msra.mxu0 %v1528
        %1569 = vmatpush.msra.mxu0 %v1527
        %1570 = vmatmul.f32.gmra.mxu0 %v1211
        %v1571 = vpop.f32.mrf.mxu0
        %v1572 = vadd.f32 0.0, %v1571
        %1573 = vmatmul.f32.gmra.mxu0 %v1214
        %v1574 = vpop.f32.mrf.mxu0
        %v1575 = vadd.f32 0.0, %v1574
        %1576 = vdwg.mxu0
        %1577 = vmatpush.msra.mxu0 0.0
        %1578 = vmatpush.msra.mxu0 0.0
        %1579 = vmatpush.msra.mxu0 0.0
        %1580 = vmatpush.msra.mxu0 0.0
        %1581 = vmatpush.msra.mxu0 0.0
        %1582 = vmatpush.msra.mxu0 0.0
        %1583 = vmatpush.msra.mxu0 0.0
        %1584 = vmatpush.msra.mxu0 0.0
        %1585 = vmatpush.msra.mxu0 0.0
        %1586 = vmatpush.msra.mxu0 0.0
        %1587 = vmatpush.msra.mxu0 0.0
        %1588 = vmatpush.msra.mxu0 0.0
        %1589 = vmatpush.msra.mxu0 0.0
        %1590 = vmatpush.msra.mxu0 0.0
        %1591 = vmatpush.msra.mxu0 %v1530
        %1592 = vmatpush.msra.mxu0 %v1529
        %1593 = vmatmul.f32.gmra.mxu0 %v1240
        %v1594 = vpop.f32.mrf.mxu0
        %v1595 = vadd.f32 0.0, %v1594
        %1596 = vmatmul.f32.gmra.mxu0 %v1243
        %v1597 = vpop.f32.mrf.mxu0
        %v1598 = vadd.f32 0.0, %v1597
        %1599 = vdwg.mxu0
        %v1600 = vsub.f32 %v1549, %v1572
        %v1601 = vsub.f32 %v1552, %v1575
        %v1602 = vsub.f32 %v1595, %v1549
        %v1603 = vsub.f32 %v1598, %v1552
        %v1604 = vsub.f32 %v1602, %v1572
        %v1605 = vsub.f32 %v1603, %v1575
        %v1606 = vadd.f32 %v1053, %v1069
        %v1607 = vadd.f32 %v1054, %v1070
        %1608 = vmatpush.msra.mxu0 0.0
        %1609 = vmatpush.msra.mxu0 0.0
        %1610 = vmatpush.msra.mxu0 0.0
        %1611 = vmatpush.msra.mxu0 0.0
        %1612 = vmatpush.msra.mxu0 0.0
        %1613 = vmatpush.msra.mxu0 0.0
        %1614 = vmatpush.msra.mxu0 0.0
        %1615 = vmatpush.msra.mxu0 0.0
        %1616 = vmatpush.msra.mxu0 0.0
        %1617 = vmatpush.msra.mxu0 0.0
        %1618 = vmatpush.msra.mxu0 0.0
        %1619 = vmatpush.msra.mxu0 0.0
        %1620 = vmatpush.msra.mxu0 0.0
        %1621 = vmatpush.msra.mxu0 0.0
        %1622 = vmatpush.msra.mxu0 %v1054
        %1623 = vmatpush.msra.mxu0 %v1053
        %1624 = vmatmul.f32.gmra.mxu0 %v1075
        %v1625 = vpop.f32.mrf.mxu0
        %v1626 = vadd.f32 0.0, %v1625
        %1627 = vmatmul.f32.gmra.mxu0 %v1078
        %v1628 = vpop.f32.mrf.mxu0
        %v1629 = vadd.f32 0.0, %v1628
        %1630 = vdwg.mxu0
        %1631 = vmatpush.msra.mxu0 0.0
        %1632 = vmatpush.msra.mxu0 0.0
        %1633 = vmatpush.msra.mxu0 0.0
        %1634 = vmatpush.msra.mxu0 0.0
        %1635 = vmatpush.msra.mxu0 0.0
        %1636 = vmatpush.msra.mxu0 0.0
        %1637 = vmatpush.msra.mxu0 0.0
        %1638 = vmatpush.msra.mxu0 0.0
        %1639 = vmatpush.msra.mxu0 0.0
        %1640 = vmatpush.msra.mxu0 0.0
        %1641 = vmatpush.msra.mxu0 0.0
        %1642 = vmatpush.msra.mxu0 0.0
        %1643 = vmatpush.msra.mxu0 0.0
        %1644 = vmatpush.msra.mxu0 0.0
        %1645 = vmatpush.msra.mxu0 %v1070
        %1646 = vmatpush.msra.mxu0 %v1069
        %1647 = vmatmul.f32.gmra.mxu0 %v1104
        %v1648 = vpop.f32.mrf.mxu0
        %v1649 = vadd.f32 0.0, %v1648
        %1650 = vmatmul.f32.gmra.mxu0 %v1107
        %v1651 = vpop.f32.mrf.mxu0
        %v1652 = vadd.f32 0.0, %v1651
        %1653 = vdwg.mxu0
        %1654 = vmatpush.msra.mxu0 0.0
        %1655 = vmatpush.msra.mxu0 0.0
        %1656 = vmatpush.msra.mxu0 0.0
        %1657 = vmatpush.msra.mxu0 0.0
        %1658 = vmatpush.msra.mxu0 0.0
        %1659 = vmatpush.msra.mxu0 0.0
        %1660 = vmatpush.msra.mxu0 0.0
        %1661 = vmatpush.msra.mxu0 0.0
        %1662 = vmatpush.msra.mxu0 0.0
        %1663 = vmatpush.msra.mxu0 0.0
        %1664 = vmatpush.msra.mxu0 0.0
        %1665 = vmatpush.msra.mxu0 0.0
        %1666 = vmatpush.msra.mxu0 0.0
        %1667 = vmatpush.msra.mxu0 0.0
        %1668 = vmatpush.msra.mxu0 %v1607
        %1669 = vmatpush.msra.mxu0 %v1606
        %1670 = vmatmul.f32.gmra.mxu0 %v1133
        %v1671 = vpop.f32.mrf.mxu0
        %v1672 = vadd.f32 0.0, %v1671
        %1673 = vmatmul.f32.gmra.mxu0 %v1136
        %v1674 = vpop.f32.mrf.mxu0
        %v1675 = vadd.f32 0.0, %v1674
        %1676 = vdwg.mxu0
        %v1677 = vsub.f32 %v1626, %v1649
        %v1678 = vsub.f32 %v1629, %v1652
        %v1679 = vsub.f32 %v1672, %v1626
        %v1680 = vsub.f32 %v1675, %v1629
        %v1681 = vsub.f32 %v1679, %v1649
        %v1682 = vsub.f32 %v1680, %v1652
        %v1683 = vsub.f32 %v906, %v1677
        %v1684 = vsub.f32 %v907, %v1678
        %v1685 = vmul.f32 %v882, %v1683
        %v1686 = vmul.f32 %v883, %v1684
        %v1687 = vadd.f32 %v1677, %v1685
        %v1688 = vadd.f32 %v1678, %v1686
        %v1689 = vsub.f32 %v914, %v1681
        %v1690 = vsub.f32 %v915, %v1682
        %v1691 = vmul.f32 %v882, %v1689
        %v1692 = vmul.f32 %v883, %v1690
        %v1693 = vadd.f32 %v1681, %v1691
        %v1694 = vadd.f32 %v1682, %v1692
        %v1695 = vadd.f32 %v1687, %v1693
        %v1696 = vadd.f32 %v1688, %v1694
        %1697 = vmatpush.msra.mxu0 0.0
        %1698 = vmatpush.msra.mxu0 0.0
        %1699 = vmatpush.msra.mxu0 0.0
        %1700 = vmatpush.msra.mxu0 0.0
        %1701 = vmatpush.msra.mxu0 0.0
        %1702 = vmatpush.msra.mxu0 0.0
        %1703 = vmatpush.msra.mxu0 0.0
        %1704 = vmatpush.msra.mxu0 0.0
        %1705 = vmatpush.msra.mxu0 0.0
        %1706 = vmatpush.msra.mxu0 0.0
        %1707 = vmatpush.msra.mxu0 0.0
        %1708 = vmatpush.msra.mxu0 0.0
        %1709 = vmatpush.msra.mxu0 0.0
        %1710 = vmatpush.msra.mxu0 0.0
        %1711 = vmatpush.msra.mxu0 %v1688
        %1712 = vmatpush.msra.mxu0 %v1687
        %1713 = vmatmul.f32.gmra.mxu0 %v1182
        %v1714 = vpop.f32.mrf.mxu0
        %v1715 = vadd.f32 0.0, %v1714
        %1716 = vmatmul.f32.gmra.mxu0 %v1185
        %v1717 = vpop.f32.mrf.mxu0
        %v1718 = vadd.f32 0.0, %v1717
        %1719 = vdwg.mxu0
        %1720 = vmatpush.msra.mxu0 0.0
        %1721 = vmatpush.msra.mxu0 0.0
        %1722 = vmatpush.msra.mxu0 0.0
        %1723 = vmatpush.msra.mxu0 0.0
        %1724 = vmatpush.msra.mxu0 0.0
        %1725 = vmatpush.msra.mxu0 0.0
        %1726 = vmatpush.msra.mxu0 0.0
        %1727 = vmatpush.msra.mxu0 0.0
        %1728 = vmatpush.msra.mxu0 0.0
        %1729 = vmatpush.msra.mxu0 0.0
        %1730 = vmatpush.msra.mxu0 0.0
        %1731 = vmatpush.msra.mxu0 0.0
        %1732 = vmatpush.msra.mxu0 0.0
        %1733 = vmatpush.msra.mxu0 0.0
        %1734 = vmatpush.msra.mxu0 %v1694
        %1735 = vmatpush.msra.mxu0 %v1693
        %1736 = vmatmul.f32.gmra.mxu0 %v1211
        %v1737 = vpop.f32.mrf.mxu0
        %v1738 = vadd.f32 0.0, %v1737
        %1739 = vmatmul.f32.gmra.mxu0 %v1214
        %v1740 = vpop.f32.mrf.mxu0
        %v1741 = vadd.f32 0.0, %v1740
        %1742 = vdwg.mxu0
        %1743 = vmatpush.msra.mxu0 0.0
        %1744 = vmatpush.msra.mxu0 0.0
        %1745 = vmatpush.msra.mxu0 0.0
        %1746 = vmatpush.msra.mxu0 0.0
        %1747 = vmatpush.msra.mxu0 0.0
        %1748 = vmatpush.msra.mxu0 0.0
        %1749 = vmatpush.msra.mxu0 0.0
        %1750 = vmatpush.msra.mxu0 0.0
        %1751 = vmatpush.msra.mxu0 0.0
        %1752 = vmatpush.msra.mxu0 0.0
        %1753 = vmatpush.msra.mxu0 0.0
        %1754 = vmatpush.msra.mxu0 0.0
        %1755 = vmatpush.msra.mxu0 0.0
        %1756 = vmatpush.msra.mxu0 0.0
        %1757 = vmatpush.msra.mxu0 %v1696
        %1758 = vmatpush.msra.mxu0 %v1695
        %1759 = vmatmul.f32.gmra.mxu0 %v1240
        %v1760 = vpop.f32.mrf.mxu0
        %v1761 = vadd.f32 0.0, %v1760
        %1762 = vmatmul.f32.gmra.mxu0 %v1243
        %v1763 = vpop.f32.mrf.mxu0
        %v1764 = vadd.f32 0.0, %v1763
        %1765 = vdwg.mxu0
        %v1766 = vsub.f32 %v1715, %v1738
        %v1767 = vsub.f32 %v1718, %v1741
        %v1768 = vsub.f32 %v1761, %v1715
        %v1769 = vsub.f32 %v1764, %v1718
        %v1770 = vsub.f32 %v1768, %v1738
        %v1771 = vsub.f32 %v1769, %v1741
        %v1772 = vadd.f32 %v1268, %v1272
        %v1773 = vadd.f32 %v1269, %v1273
        %v1774 = vadd.f32 %v1434, %v1438
        %v1775 = vadd.f32 %v1435, %v1439
        %v1776 = vadd.f32 %v1600, %v1604
        %v1777 = vadd.f32 %v1601, %v1605
        %v1778 = vadd.f32 %v1766, %v1770
        %v1779 = vadd.f32 %v1767, %v1771
        %1780 = vmatpush.msra.mxu0 %v829
        %1781 = vmatpush.msra.mxu0 %v828
        %1782 = vmatpush.msra.mxu0 %v827
        %1783 = vmatpush.msra.mxu0 %v826
        %1784 = vmatpush.msra.mxu0 %v825
        %1785 = vmatpush.msra.mxu0 %v824
        %1786 = vmatpush.msra.mxu0 %v823
        %1787 = vmatpush.msra.mxu0 %v822
        %1788 = vmatpush.msra.mxu0 %v821
        %1789 = vmatpush.msra.mxu0 %v820
        %1790 = vmatpush.msra.mxu0 %v819
        %1791 = vmatpush.msra.mxu0 %v818
        %1792 = vmatpush.msra.mxu0 %v817
        %1793 = vmatpush.msra.mxu0 %v816
        %1794 = vmatpush.msra.mxu0 %v815
        %1795 = vmatpush.msra.mxu0 %v814
        %1796 = vmatmul.f32.gmra.mxu0 %v1268
        %v1797 = vpop.f32.mrf.mxu0
        %v1798 = vadd.f32 0.0, %v1797
        %1799 = vmatmul.f32.gmra.mxu0 %v1269
        %v1800 = vpop.f32.mrf.mxu0
        %v1801 = vadd.f32 0.0, %v1800
        %1802 = vmatmul.f32.gmra.mxu0 %v1434
        %v1803 = vpop.f32.mrf.mxu0
        %v1804 = vadd.f32 0.0, %v1803
        %1805 = vmatmul.f32.gmra.mxu0 %v1435
        %v1806 = vpop.f32.mrf.mxu0
        %v1807 = vadd.f32 0.0, %v1806
        %1808 = vmatmul.f32.gmra.mxu0 %v1600
        %v1809 = vpop.f32.mrf.mxu0
        %v1810 = vadd.f32 0.0, %v1809
        %1811 = vmatmul.f32.gmra.mxu0 %v1601
        %v1812 = vpop.f32.mrf.mxu0
        %v1813 = vadd.f32 0.0, %v1812
        %1814 = vmatmul.f32.gmra.mxu0 %v1766
        %v1815 = vpop.f32.mrf.mxu0
        %v1816 = vadd.f32 0.0, %v1815
        %1817 = vmatmul.f32.gmra.mxu0 %v1767
        %v1818 = vpop.f32.mrf.mxu0
        %v1819 = vadd.f32 0.0, %v1818
        %1820 = vdwg.mxu0
        %1821 = vmatpush.msra.mxu0 %v845
        %1822 = vmatpush.msra.mxu0 %v844
        %1823 = vmatpush.msra.mxu0 %v843
        %1824 = vmatpush.msra.mxu0 %v842
        %1825 = vmatpush.msra.mxu0 %v841
        %1826 = vmatpush.msra.mxu0 %v840
        %1827 = vmatpush.msra.mxu0 %v839
        %1828 = vmatpush.msra.mxu0 %v838
        %1829 = vmatpush.msra.mxu0 %v837
        %1830 = vmatpush.msra.mxu0 %v836
        %1831 = vmatpush.msra.mxu0 %v835
        %1832 = vmatpush.msra.mxu0 %v834
        %1833 = vmatpush.msra.mxu0 %v833
        %1834 = vmatpush.msra.mxu0 %v832
        %1835 = vmatpush.msra.mxu0 %v831
        %1836 = vmatpush.msra.mxu0 %v830
        %1837 = vmatmul.f32.gmra.mxu0 %v1272
        %v1838 = vpop.f32.mrf.mxu0
        %v1839 = vadd.f32 0.0, %v1838
        %1840 = vmatmul.f32.gmra.mxu0 %v1273
        %v1841 = vpop.f32.mrf.mxu0
        %v1842 = vadd.f32 0.0, %v1841
        %1843 = vmatmul.f32.gmra.mxu0 %v1438
        %v1844 = vpop.f32.mrf.mxu0
        %v1845 = vadd.f32 0.0, %v1844
        %1846 = vmatmul.f32.gmra.mxu0 %v1439
        %v1847 = vpop.f32.mrf.mxu0
        %v1848 = vadd.f32 0.0, %v1847
        %1849 = vmatmul.f32.gmra.mxu0 %v1604
        %v1850 = vpop.f32.mrf.mxu0
        %v1851 = vadd.f32 0.0, %v1850
        %1852 = vmatmul.f32.gmra.mxu0 %v1605
        %v1853 = vpop.f32.mrf.mxu0
        %v1854 = vadd.f32 0.0, %v1853
        %1855 = vmatmul.f32.gmra.mxu0 %v1770
        %v1856 = vpop.f32.mrf.mxu0
        %v1857 = vadd.f32 0.0, %v1856
        %1858 = vmatmul.f32.gmra.mxu0 %v1771
        %v1859 = vpop.f32.mrf.mxu0
        %v1860 = vadd.f32 0.0, %v1859
        %1861 = vdwg.mxu0
        %1862 = vmatpush.msra.mxu0 %v881
        %1863 = vmatpush.msra.mxu0 %v880
        %1864 = vmatpush.msra.mxu0 %v879
        %1865 = vmatpush.msra.mxu0 %v878
        %1866 = vmatpush.msra.mxu0 %v877
        %1867 = vmatpush.msra.mxu0 %v876
        %1868 = vmatpush.msra.mxu0 %v875
        %1869 = vmatpush.msra.mxu0 %v874
        %1870 = vmatpush.msra.mxu0 %v873
        %1871 = vmatpush.msra.mxu0 %v872
        %1872 = vmatpush.msra.mxu0 %v871
        %1873 = vmatpush.msra.mxu0 %v870
        %1874 = vmatpush.msra.mxu0 %v869
        %1875 = vmatpush.msra.mxu0 %v868
        %1876 = vmatpush.msra.mxu0 %v867
        %1877 = vmatpush.msra.mxu0 %v866
        %1878 = vmatmul.f32.gmra.mxu0 %v1772
        %v1879 = vpop.f32.mrf.mxu0
        %v1880 = vadd.f32 0.0, %v1879
        %1881 = vmatmul.f32.gmra.mxu0 %v1773
        %v1882 = vpop.f32.mrf.mxu0
        %v1883 = vadd.f32 0.0, %v1882
        %1884 = vmatmul.f32.gmra.mxu0 %v1774
        %v1885 = vpop.f32.mrf.mxu0
        %v1886 = vadd.f32 0.0, %v1885
        %1887 = vmatmul.f32.gmra.mxu0 %v1775
        %v1888 = vpop.f32.mrf.mxu0
        %v1889 = vadd.f32 0.0, %v1888
        %1890 = vmatmul.f32.gmra.mxu0 %v1776
        %v1891 = vpop.f32.mrf.mxu0
        %v1892 = vadd.f32 0.0, %v1891
        %1893 = vmatmul.f32.gmra.mxu0 %v1777
        %v1894 = vpop.f32.mrf.mxu0
        %v1895 = vadd.f32 0.0, %v1894
        %1896 = vmatmul.f32.gmra.mxu0 %v1778
        %v1897 = vpop.f32.mrf.mxu0
        %v1898 = vadd.f32 0.0, %v1897
        %1899 = vmatmul.f32.gmra.mxu0 %v1779
        %v1900 = vpop.f32.mrf.mxu0
        %v1901 = vadd.f32 0.0, %v1900
        %1902 = vdwg.mxu0
        %v1903 = vsub.f32 %v1798, %v1839
        %v1904 = vsub.f32 %v1801, %v1842
        %v1905 = vsub.f32 %v1804, %v1845
        %v1906 = vsub.f32 %v1807, %v1848
        %v1907 = vsub.f32 %v1810, %v1851
        %v1908 = vsub.f32 %v1813, %v1854
        %v1909 = vsub.f32 %v1816, %v1857
        %v1910 = vsub.f32 %v1819, %v1860
        %v1911 = vsub.f32 %v1880, %v1798
        %v1912 = vsub.f32 %v1883, %v1801
        %v1913 = vsub.f32 %v1886, %v1804
        %v1914 = vsub.f32 %v1889, %v1807
        %v1915 = vsub.f32 %v1892, %v1810
        %v1916 = vsub.f32 %v1895, %v1813
        %v1917 = vsub.f32 %v1898, %v1816
        %v1918 = vsub.f32 %v1901, %v1819
        %v1919 = vsub.f32 %v1911, %v1839
        %v1920 = vsub.f32 %v1912, %v1842
        %v1921 = vsub.f32 %v1913, %v1845
        %v1922 = vsub.f32 %v1914, %v1848
        %v1923 = vsub.f32 %v1915, %v1851
        %v1924 = vsub.f32 %v1916, %v1854
        %v1925 = vsub.f32 %v1917, %v1857
        %v1926 = vsub.f32 %v1918, %v1860
        %1927 = vst [vmem:[%s760] sm:$0xff] %v1903
        %1928 = vst [vmem:[%s760 + $0x8] sm:$0xff] %v1904
        %1929 = vst [vmem:[%s760 + $0x10] sm:$0xff] %v1905
        %1930 = vst [vmem:[%s760 + $0x18] sm:$0xff] %v1906
        %1931 = vst [vmem:[%s760 + $0x20] sm:$0xff] %v1907
        %1932 = vst [vmem:[%s760 + $0x28] sm:$0xff] %v1908
        %1933 = vst [vmem:[%s760 + $0x30] sm:$0xff] %v1909
        %1934 = vst [vmem:[%s760 + $0x38] sm:$0xff] %v1910
        %1935 = vst [vmem:[%s767] sm:$0xff] %v1919
        %1936 = vst [vmem:[%s767 + $0x8] sm:$0xff] %v1920
        %1937 = vst [vmem:[%s767 + $0x10] sm:$0xff] %v1921
        %1938 = vst [vmem:[%s767 + $0x18] sm:$0xff] %v1922
        %1939 = vst [vmem:[%s767 + $0x20] sm:$0xff] %v1923
        %1940 = vst [vmem:[%s767 + $0x28] sm:$0xff] %v1924
        %1941 = vst [vmem:[%s767 + $0x30] sm:$0xff] %v1925
        %1942 = vst [vmem:[%s767 + $0x38] sm:$0xff] %v1926
        %s1943 = sand.u32 %s344, 1
        %s1944 = scalar_lea.sflag [#allocation4], %s1943
        %s1945 = sand.u32 %s344, 1
        %s1946 = smul.addr %s1945, 64
        %s1947 = scalar_lea.vmem [#allocation23], %s1946
        %s1948 = sand.u32 %s370, 1
        %s1949 = scalar_lea.sflag [#allocation25], %s1948
        %s1950 = sand.u32 %s370, 1
        %s1951 = smul.addr %s1950, 64
        %s1952 = scalar_lea.vmem [#allocation24], %s1951
        // Predicated region
        $region125: #{tpu_custom_call.1} parent=71 // pred_check
          %p1953 = pneg %p354
        $region126: #{tpu_custom_call.1} parent=71 // pred_check_branch
          %1955 = sbr.rel (%p1953) target = $region128
        $region127: #{tpu_custom_call.1} parent=71 // pred_region
          %s1956 = smul.u32 8, %s43
          %1958 = vsyncadd %s1944, 0
          %s1959 = smul.addr %s1956, 8
          %s1960 = scalar_lea.hbm %s13, %s1959
          %s1961 = sshll.u32 %s1947, 4
          %s1962 = int_to_ptr.vmem [resolvable:$true] %s1961
          %s1963 = sshll.u32 %s1960, 4
          %s1964 = int_to_ptr.hbm [resolvable:$true] %s1963
          %1969 = dma.vmem_to_hbm [thread:$0]  %s1962, 1024, %s1964, %s1944, 128, 128, 8
        $region128: #{tpu_custom_call.1} parent=71 // pred_fallthru
          _
        // Predicated region
        $region129: #{tpu_custom_call.1} parent=71 // pred_check
          %p1970 = pneg %p380
        $region130: #{tpu_custom_call.1} parent=71 // pred_check_branch
          %1972 = sbr.rel (%p1970) target = $region132
        $region131: #{tpu_custom_call.1} parent=71 // pred_region
          %s1973 = smul.u32 8, %s43
          %1975 = vsyncadd %s1949, 0
          %s1976 = smul.addr %s1973, 8
          %s1977 = scalar_lea.hbm %s14, %s1976
          %s1978 = sshll.u32 %s1952, 4
          %s1979 = int_to_ptr.vmem [resolvable:$true] %s1978
          %s1980 = sshll.u32 %s1977, 4
          %s1981 = int_to_ptr.hbm [resolvable:$true] %s1980
          %1986 = dma.vmem_to_hbm [thread:$0]  %s1979, 1024, %s1981, %s1949, 128, 128, 8
        $region132: #{tpu_custom_call.1} parent=71 // pred_fallthru
          _
      $region72: #{tpu_custom_call.1} parent=5 // pred_fallthru
        _
      %p1987 = scmp.le.s32.totalorder 2, %s38
      // Predicated region
      $region133: #{tpu_custom_call.1} parent=5 // pred_check
        %p1988 = pneg %p1987
      $region134: #{tpu_custom_call.1} parent=5 // pred_check_branch
        %1990 = sbr.rel (%p1988) target = $region136
      $region135: #{tpu_custom_call.1} parent=5 // pred_region
        %s1991 = ssub.s32 %s38, 2
        // Predicated region
        $region137: #{tpu_custom_call.1} parent=135 // pred_check
          %p1992 = pneg %p360
        $region138: #{tpu_custom_call.1} parent=135 // pred_check_branch
          %1994 = sbr.rel (%p1992) target = $region140
        $region139: #{tpu_custom_call.1} parent=135 // pred_region
          %s1995 = sand.u32 %s345, 1
          %s1996 = scalar_lea.sflag [#allocation4], %s1995
          %s1997 = sand.u32 %s345, 1
          %s1998 = smul.addr %s1997, 64
          %s1999 = scalar_lea.vmem [#allocation23], %s1998
          %2001 = dma.done %s1996, 1024
        $region140: #{tpu_custom_call.1} parent=135 // pred_fallthru
          _
        // Predicated region
        $region141: #{tpu_custom_call.1} parent=135 // pred_check
          %p2002 = pneg %p386
        $region142: #{tpu_custom_call.1} parent=135 // pred_check_branch
          %2004 = sbr.rel (%p2002) target = $region144
        $region143: #{tpu_custom_call.1} parent=135 // pred_region
          %s2005 = sand.u32 %s371, 1
          %s2006 = scalar_lea.sflag [#allocation25], %s2005
          %s2007 = sand.u32 %s371, 1
          %s2008 = smul.addr %s2007, 64
          %s2009 = scalar_lea.vmem [#allocation24], %s2008
          %2011 = dma.done %s2006, 1024
        $region144: #{tpu_custom_call.1} parent=135 // pred_fallthru
          _
      $region136: #{tpu_custom_call.1} parent=5 // pred_fallthru
        _
    $region6: #{tpu_custom_call.1} parent=1 // loop_footer
      %s42 = sadd.s32 1, %s38
    $region7: #{tpu_custom_call.1} parent=1 // loop_footer_branch
      %37 = sbr.rel target = $region3
    $region8: #{tpu_custom_call.1} parent=1 // loop_exit
      _
    %2012 = vsyncpa [#allocation3], 1
    %s2013 = scalar_lea.sflag [#allocation3], 1
    %2014 = vsyncpa %s2013, 1
    %2015 = vsyncpa [#allocation6], 1
    %2016 = vsyncpa [#allocation9], 1
    %2017 = vsyncpa [#allocation12], 1
    %2018 = vsyncpa [#allocation15], 1
    %2019 = vsyncpa [#allocation18], 1
    %s2020 = scalar_lea.sflag [#allocation18], 1
    %2021 = vsyncpa %s2020, 1
    %2022 = vsyncpa [#allocation21], 1
    %s2023 = scalar_lea.sflag [#allocation21], 1
    %2024 = vsyncpa %s2023, 1
    %2025 = vsyncpa [#allocation4], 1
    %s2026 = scalar_lea.sflag [#allocation4], 1
    %2027 = vsyncpa %s2026, 1
    %2028 = vsyncpa [#allocation25], 1
    %s2029 = scalar_lea.sflag [#allocation25], 1
    %2030 = vsyncpa %s2029, 1

</llo_original>
